<compile_context>
chip_gen: v5e
topology: v5e:2x2
jax: 0.10.0
libtpu: 0.0.40
codegen_flags: <defaults>
</compile_context>

<pallas_src>
import functools

import jax
import jax.numpy as jnp
from jax import lax
from jax.experimental import pallas as pl
from jax.experimental.pallas import tpu as pltpu


# ----------------------------- kernel A: gram + softmax -----------------------------
def _gram_softmax_kernel(x_ref, wqk_ref, bqk_ref, temp_ref, attn_ref,
                         g_ref, sq_ref, sk_ref, *, heads, eps):
    # x_ref:   (C, TN)  f32   (one batch, one sequence tile; N on the lane axis)
    # wqk_ref: (2C, C)  bf16  (fused [Wq; Wk])
    # bqk_ref: (2C, 1)  f32
    # temp_ref:(heads, 1, 1) f32
    # attn_ref:(heads, ch, ch) f32   output (written on the last N tile)
    # g_ref:   (heads, ch, ch) f32   gram accumulator
    # sq_ref / sk_ref: (heads, ch, 1) f32  sum-of-squares accumulators
    t = pl.program_id(1)

    @pl.when(t == 0)
    def _init():
        g_ref[...] = jnp.zeros_like(g_ref)
        sq_ref[...] = jnp.zeros_like(sq_ref)
        sk_ref[...] = jnp.zeros_like(sk_ref)

    two_c, c = wqk_ref.shape
    ch = c // heads
    tn = x_ref.shape[1]

    # Fused Q/K projection: one MXU pass over the x tile (bf16 operands, f32 acc).
    x_bf = x_ref[...].astype(jnp.bfloat16)
    qk = jnp.dot(wqk_ref[...], x_bf, preferred_element_type=jnp.float32)
    qk = qk + bqk_ref[...]                                   # (2C, TN) f32

    q = qk[:c, :].reshape(heads, ch, tn)                     # (heads, ch, TN)
    k = qk[c:, :].reshape(heads, ch, tn)

    # Accumulate ||q||^2, ||k||^2 over the sequence axis (lane reduction).
    sq_ref[...] += jnp.sum(q * q, axis=-1, keepdims=True)
    sk_ref[...] += jnp.sum(k * k, axis=-1, keepdims=True)

    # Per-head gram, contracting over the (large) sequence tile on the MXU.
    g_ref[...] += lax.dot_general(
        q.astype(jnp.bfloat16), k.astype(jnp.bfloat16),
        dimension_numbers=(((2,), (2,)), ((0,), (0,))),
        preferred_element_type=jnp.float32)                  # (heads, ch, ch)

    @pl.when(t == pl.num_programs(1) - 1)
    def _finalize():
        eps_f = jnp.float32(eps)
        # temperature and 1/max(||q||, eps) folded into one row scale (EUP recip).
        inv_q = temp_ref[...] * pl.reciprocal(
            jnp.maximum(jnp.sqrt(sq_ref[...]), eps_f), approx=True)   # (heads, ch, 1)
        inv_k = pl.reciprocal(
            jnp.maximum(jnp.sqrt(sk_ref[...]), eps_f), approx=True)   # (heads, ch, 1)
        # Rank-1 batched outer product inv_q[i] * inv_k[j] -> (heads, ch, ch)
        scale = lax.dot_general(inv_q, inv_k,
                                dimension_numbers=(((2,), (2,)), ((0,), (0,))),
                                preferred_element_type=jnp.float32)
        logits = g_ref[...] * scale
        m = jnp.max(logits, axis=-1, keepdims=True)
        e = jnp.exp(logits - m)
        attn_ref[...] = e * pl.reciprocal(
            jnp.sum(e, axis=-1, keepdims=True), approx=True)


# ----------------------------- kernel B: apply + project + residual -----------------
def _apply_kernel(x_ref, attn_ref, wv_ref, bv_ref, wp_ref, bp_ref, o_ref, *, heads):
    # x_ref: (C, TN) f32   attn_ref: (heads, ch, ch) f32
    # wv_ref/wp_ref: (C, C) bf16   bv_ref/bp_ref: (C, 1) f32   o_ref: (C, TN)
    c, tn = x_ref.shape
    ch = c // heads

    x = x_ref[...]
    x_bf = x.astype(jnp.bfloat16)

    v = jnp.dot(wv_ref[...], x_bf, preferred_element_type=jnp.float32) + bv_ref[...]
    v = v.reshape(heads, ch, tn).astype(jnp.bfloat16)

    a = attn_ref[...].astype(jnp.bfloat16)
    # out[h, i, n] = sum_j attn[h, i, j] * v[h, j, n]  (lane-dense (ch, TN) tiles)
    out = lax.dot_general(a, v,
                          dimension_numbers=(((2,), (1,)), ((0,), (0,))),
                          preferred_element_type=jnp.float32)          # (heads, ch, TN)
    out = out.reshape(c, tn).astype(jnp.bfloat16)                      # head-major channels

    y = jnp.dot(wp_ref[...], out, preferred_element_type=jnp.float32) + bp_ref[...]
    o_ref[...] = (y + x).astype(o_ref.dtype)


# ----------------------------------- wrapper -----------------------------------------
def _pick_seq_tile(n, requested=None):
    if requested is not None:
        assert requested == n or (requested % 128 == 0 and n % requested == 0), \
            "sequence tile must be N or a 128-multiple divisor of N"
        return requested
    for t in (1024, 512, 256, 128):
        if n % t == 0:
            return t
    return n  # small / odd N: single tile (block == full dims is always legal)


def _vmem_limit_bytes(c, tn, heads):
    ch = c // heads
    est = (
        2 * 2 * (c * tn * 4)            # x + out blocks, double-buffered, f32
        + 2 * (4 * c * c * 2)           # fused qk + wv + wp weights, bf16, dbl-buffered
        + 6 * c * tn * 4                # qk / v / head intermediates (upper bound)
        + 8 * heads * ch * ch * 4       # gram / attn / scratch
    )
    return int(min(max(2 * est, 16 * 2**20), 48 * 2**20))


def ca_attention(x, params, heads=4, seq_tile=None):
    """x: (B, N, C) float32.  Returns (B, N, C).  Matches CAAttention.forward."""
    B, N, C = x.shape
    assert C % heads == 0
    ch = C // heads
    tn = _pick_seq_tile(N, seq_tile)
    nt = N // tn

    # Lane-dense layout: sequence axis N on the 128-lane axis inside the kernels.
    xt = jnp.transpose(x, (0, 2, 1))                               # (B, C, N)

    # Fused Q|K weights/bias; conv 1x1 weights used as (C_out, C_in) matmuls.
    wqk = jnp.concatenate([params["wq"], params["wk"]], axis=0).astype(jnp.bfloat16)
    bqk = jnp.concatenate([params["bq"], params["bk"]], axis=0).reshape(2 * C, 1)
    wv = params["wv"].astype(jnp.bfloat16)
    bv = params["bv"].reshape(C, 1).astype(jnp.float32)
    wp = params["wp"].astype(jnp.bfloat16)
    bp = params["bp"].reshape(C, 1).astype(jnp.float32)
    temp = params["temperature"].reshape(heads, 1, 1).astype(jnp.float32)

    vmem = _vmem_limit_bytes(C, tn, heads)

    # ---- pass 1: per-head channel-channel attention matrix (B, heads, ch, ch) ----
    attn = pl.pallas_call(
        functools.partial(_gram_softmax_kernel, heads=heads, eps=1e-12),
        out_shape=jax.ShapeDtypeStruct((B, heads, ch, ch), jnp.float32),
        grid=(B, nt),
        in_specs=[
            pl.BlockSpec((None, C, tn), lambda b, t: (b, 0, t)),       # x tile
            pl.BlockSpec((2 * C, C), lambda b, t: (0, 0)),             # fused Wq|Wk
            pl.BlockSpec((2 * C, 1), lambda b, t: (0, 0)),             # fused bq|bk
            pl.BlockSpec((heads, 1, 1), lambda b, t: (0, 0, 0)),       # temperature
        ],
        out_specs=pl.BlockSpec((None, heads, ch, ch), lambda b, t: (b, 0, 0, 0)),
        scratch_shapes=[
            pltpu.VMEM((heads, ch, ch), jnp.float32),   # gram accumulator
            pltpu.VMEM((heads, ch, 1), jnp.float32),    # sum q^2
            pltpu.VMEM((heads, ch, 1), jnp.float32),    # sum k^2
        ],
        compiler_params=pltpu.CompilerParams(
            dimension_semantics=("parallel", "arbitrary"),
            vmem_limit_bytes=vmem),
    )(xt, wqk, bqk, temp)

    # ---- pass 2: apply attention, output projection, residual (fully parallel) ----
    yt = pl.pallas_call(
        functools.partial(_apply_kernel, heads=heads),
        out_shape=jax.ShapeDtypeStruct((B, C, N), x.dtype),
        grid=(B, nt),
        in_specs=[
            pl.BlockSpec((None, C, tn), lambda b, t: (b, 0, t)),             # x tile
            pl.BlockSpec((None, heads, ch, ch), lambda b, t: (b, 0, 0, 0)),  # attn
            pl.BlockSpec((C, C), lambda b, t: (0, 0)),                       # Wv
            pl.BlockSpec((C, 1), lambda b, t: (0, 0)),                       # bv
            pl.BlockSpec((C, C), lambda b, t: (0, 0)),                       # Wp
            pl.BlockSpec((C, 1), lambda b, t: (0, 0)),                       # bp
        ],
        out_specs=pl.BlockSpec((None, C, tn), lambda b, t: (b, 0, t)),
        compiler_params=pltpu.CompilerParams(
            dimension_semantics=("parallel", "parallel"),
            vmem_limit_bytes=vmem),
    )(xt, attn, wv, bv, wp, bp)

    return jnp.transpose(yt, (0, 2, 1))                            # back to (B, N, C)


# --------------------------- pure-JAX reference & params -----------------------------
def ca_attention_ref(x, params, heads=4):
    """Pure-JAX reference mirroring the PyTorch forward exactly (f32)."""
    B, N, C = x.shape
    ch = C // heads

    def lin(t, w, b):  # conv2d 1x1 on (B, C, N, 1)  ==  t @ w.T + b in (B,N,C)
        return jnp.einsum('bnc,dc->bnd', t, w) + b

    q = lin(x, params['wq'], params['bq'])
    k = lin(x, params['wk'], params['bk'])
    v = lin(x, params['wv'], params['bv'])

    def to_heads(t):  # 'b (head c) h w -> b head c (h w)'
        return t.reshape(B, N, heads, ch).transpose(0, 2, 3, 1)   # (B, H, ch, N)

    q, k, v = to_heads(q), to_heads(k), to_heads(v)
    qn = q / jnp.maximum(jnp.linalg.norm(q, axis=-1, keepdims=True), 1e-12)
    kn = k / jnp.maximum(jnp.linalg.norm(k, axis=-1, keepdims=True), 1e-12)
    attn = jnp.einsum('bhcn,bhdn->bhcd', qn, kn)
    attn = attn * params['temperature'][None, :, None, None]
    attn = jax.nn.softmax(attn, axis=-1)
    out = jnp.einsum('bhcd,bhdn->bhcn', attn, v)                  # (B, H, ch, N)
    out = out.transpose(0, 3, 1, 2).reshape(B, N, C)
    out = jnp.einsum('bnc,dc->bnd', out, params['wp']) + params['bp']
    return out + x


def init_params(key, channels, heads):
    ks = jax.random.split(key, 8)
    return {
        "wq": jax.random.normal(ks[0], (channels, channels), jnp.float32) * 0.1,
        "bq": jax.random.normal(ks[1], (channels,), jnp.float32) * 0.1,
        "wk": jax.random.normal(ks[2], (channels, channels), jnp.float32) * 0.1,
        "bk": jax.random.normal(ks[3], (channels,), jnp.float32) * 0.1,
        "wv": jax.random.normal(ks[4], (channels, channels), jnp.float32) * 0.1,
        "bv": jax.random.normal(ks[5], (channels,), jnp.float32) * 0.1,
        "wp": jax.random.normal(ks[6], (channels, channels), jnp.float32) * 0.1,
        "bp": jax.random.normal(ks[7], (channels,), jnp.float32) * 0.1,
        "temperature": jnp.ones((heads,), jnp.float32),  # nn.Parameter(ones(heads,1,1))
    }


if __name__ == "__main__":
    B, N, C, HEADS = 2, 256, 64, 4
    key = jax.random.PRNGKey(0)
    k_x, k_p = jax.random.split(key)
    x = jax.random.normal(k_x, (B, N, C), jnp.float32)
    params = init_params(k_p, C, HEADS)

    # seq_tile=128 -> 2 sequence tiles, exercising the N-tiled accumulation path.
    out = ca_attention(x, params, heads=HEADS, seq_tile=128)
    out = jax.block_until_ready(out)

    ref = ca_attention_ref(x, params, heads=HEADS)
    err = jnp.max(jnp.abs(out - ref))
    assert out.shape == (B, N, C)
    # bf16 MXU operands + approx reciprocals -> loosened tolerance vs. the f32 reference.
    assert jnp.allclose(out, ref, rtol=5e-2, atol=5e-2), f"max abs err {err}"

    print("KERNEL_OK")
</pallas_src>

<mosaic_0001>
module attributes {stable_mosaic.version = 11 : i64} {
  func.func @_gram_softmax_kernel(%arg0: i32, %arg1: i32, %arg2: memref<1x64x128xf32, #tpu.memory_space<vmem>>, %arg3: memref<128x64xbf16, #tpu.memory_space<vmem>>, %arg4: memref<128x1xf32, #tpu.memory_space<vmem>>, %arg5: memref<4x1x1xf32, #tpu.memory_space<vmem>>, %arg6: memref<1x4x16x16xf32, #tpu.memory_space<vmem>>, %arg7: memref<4x16x16xf32, #tpu.memory_space<vmem>>, %arg8: memref<4x16x1xf32, #tpu.memory_space<vmem>>, %arg9: memref<4x16x1xf32, #tpu.memory_space<vmem>>) attributes {dimension_semantics = [#tpu.dimension_semantics<parallel>, #tpu.dimension_semantics<arbitrary>], iteration_bounds = array<i64: 2, 2>, scalar_prefetch = 0 : i64, scratch_operands = 3 : i64, tpu.core_type = #tpu.core_type<tc>, window_params = [{transform_indices = @transform_0, window_bounds = array<i64: 1, 64, 128>}, {pipeline_mode = #tpu.pipeline_mode<synchronous>, transform_indices = @transform_1, window_bounds = array<i64: 128, 64>}, {pipeline_mode = #tpu.pipeline_mode<synchronous>, transform_indices = @transform_2, window_bounds = array<i64: 128, 1>}, {pipeline_mode = #tpu.pipeline_mode<synchronous>, transform_indices = @transform_3, window_bounds = array<i64: 4, 1, 1>}, {transform_indices = @transform_4, window_bounds = array<i64: 1, 4, 16, 16>}]} {
    %c0_i32 = arith.constant 0 : i32
    %0 = arith.cmpi eq, %arg1, %c0_i32 : i32
    %1 = arith.extui %0 : i1 to i32
    %c0_i32_0 = arith.constant 0 : i32
    %2 = arith.cmpi ne, %1, %c0_i32_0 : i32
    scf.if %2 {
      %cst_29 = arith.constant 0.000000e+00 : f32
      %36 = vector.broadcast %cst_29 : f32 to vector<4x16x16xf32>
      %c0_30 = arith.constant 0 : index
      %c0_31 = arith.constant 0 : index
      %c0_32 = arith.constant 0 : index
      %37 = vector.load %arg7[%c0_30, %c0_31, %c0_32] : memref<4x16x16xf32, #tpu.memory_space<vmem>>, vector<4x16x16xf32>
      tpu.vector_store %arg7[%c0_30, %c0_31, %c0_32], %36 {strides = array<i32>} : memref<4x16x16xf32, #tpu.memory_space<vmem>>, vector<4x16x16xf32>,
      %cst_33 = arith.constant 0.000000e+00 : f32
      %38 = vector.broadcast %cst_33 : f32 to vector<4x16x1xf32>
      %c0_34 = arith.constant 0 : index
      %c0_35 = arith.constant 0 : index
      %c0_36 = arith.constant 0 : index
      %39 = vector.load %arg8[%c0_34, %c0_35, %c0_36] : memref<4x16x1xf32, #tpu.memory_space<vmem>>, vector<4x16x1xf32>
      tpu.vector_store %arg8[%c0_34, %c0_35, %c0_36], %38 {strides = array<i32>} : memref<4x16x1xf32, #tpu.memory_space<vmem>>, vector<4x16x1xf32>,
      %cst_37 = arith.constant 0.000000e+00 : f32
      %40 = vector.broadcast %cst_37 : f32 to vector<4x16x1xf32>
      %c0_38 = arith.constant 0 : index
      %c0_39 = arith.constant 0 : index
      %c0_40 = arith.constant 0 : index
      %41 = vector.load %arg9[%c0_38, %c0_39, %c0_40] : memref<4x16x1xf32, #tpu.memory_space<vmem>>, vector<4x16x1xf32>
      tpu.vector_store %arg9[%c0_38, %c0_39, %c0_40], %40 {strides = array<i32>} : memref<4x16x1xf32, #tpu.memory_space<vmem>>, vector<4x16x1xf32>,
    } else {
    }
    %c0 = arith.constant 0 : index
    %c0_1 = arith.constant 0 : index
    %c0_2 = arith.constant 0 : index
    %3 = vector.load %arg2[%c0, %c0_1, %c0_2] : memref<1x64x128xf32, #tpu.memory_space<vmem>>, vector<1x64x128xf32>
    %4 = vector.shape_cast %3 : vector<1x64x128xf32> to vector<64x128xf32>
    %5 = arith.truncf %4 : vector<64x128xf32> to vector<64x128xbf16>
    %c0_3 = arith.constant 0 : index
    %c0_4 = arith.constant 0 : index
    %6 = vector.load %arg3[%c0_3, %c0_4] : memref<128x64xbf16, #tpu.memory_space<vmem>>, vector<128x64xbf16>
    %cst = arith.constant dense<0.000000e+00> : vector<128x128xf32>
    %7 = tpu.matmul %6, %5, %cst {dimension_numbers = #tpu.dot_dimension_numbers<[1], [0], [0], [1], [0, 0, 1, 1], [], []>} : vector<128x64xbf16>, vector<64x128xbf16>, vector<128x128xf32> -> vector<128x128xf32>
    %c0_5 = arith.constant 0 : index
    %c0_6 = arith.constant 0 : index
    %8 = vector.load %arg4[%c0_5, %c0_6] : memref<128x1xf32, #tpu.memory_space<vmem>>, vector<128x1xf32>
    %9 = vector.broadcast %8 : vector<128x1xf32> to vector<128x128xf32>
    %10 = arith.addf %7, %9 : vector<128x128xf32>
    %11 = vector.extract_strided_slice %10 {offsets = [0, 0], sizes = [64, 128], strides = [1, 1]} : vector<128x128xf32> to vector<64x128xf32>
    %12 = vector.shape_cast %11 : vector<64x128xf32> to vector<4x16x128xf32>
    %13 = vector.extract_strided_slice %10 {offsets = [64, 0], sizes = [64, 128], strides = [1, 1]} : vector<128x128xf32> to vector<64x128xf32>
    %14 = vector.shape_cast %13 : vector<64x128xf32> to vector<4x16x128xf32>
    %c0_7 = arith.constant 0 : index
    %c0_8 = arith.constant 0 : index
    %c0_9 = arith.constant 0 : index
    %15 = vector.load %arg8[%c0_7, %c0_8, %c0_9] : memref<4x16x1xf32, #tpu.memory_space<vmem>>, vector<4x16x1xf32>
    %16 = arith.mulf %12, %12 : vector<4x16x128xf32>
    %cst_10 = arith.constant dense<0.000000e+00> : vector<4x16xf32>
    %17 = vector.multi_reduction <add>, %16, %cst_10 [2] : vector<4x16x128xf32> to vector<4x16xf32>
    %18 = vector.shape_cast %17 : vector<4x16xf32> to vector<4x16x1xf32>
    %19 = arith.addf %15, %18 : vector<4x16x1xf32>
    %c0_11 = arith.constant 0 : index
    %c0_12 = arith.constant 0 : index
    %c0_13 = arith.constant 0 : index
    %20 = vector.load %arg8[%c0_11, %c0_12, %c0_13] : memref<4x16x1xf32, #tpu.memory_space<vmem>>, vector<4x16x1xf32>
    tpu.vector_store %arg8[%c0_11, %c0_12, %c0_13], %19 {strides = array<i32>} : memref<4x16x1xf32, #tpu.memory_space<vmem>>, vector<4x16x1xf32>,
    %c0_14 = arith.constant 0 : index
    %c0_15 = arith.constant 0 : index
    %c0_16 = arith.constant 0 : index
    %21 = vector.load %arg9[%c0_14, %c0_15, %c0_16] : memref<4x16x1xf32, #tpu.memory_space<vmem>>, vector<4x16x1xf32>
    %22 = arith.mulf %14, %14 : vector<4x16x128xf32>
    %cst_17 = arith.constant dense<0.000000e+00> : vector<4x16xf32>
    %23 = vector.multi_reduction <add>, %22, %cst_17 [2] : vector<4x16x128xf32> to vector<4x16xf32>
    %24 = vector.shape_cast %23 : vector<4x16xf32> to vector<4x16x1xf32>
    %25 = arith.addf %21, %24 : vector<4x16x1xf32>
    %c0_18 = arith.constant 0 : index
    %c0_19 = arith.constant 0 : index
    %c0_20 = arith.constant 0 : index
    %26 = vector.load %arg9[%c0_18, %c0_19, %c0_20] : memref<4x16x1xf32, #tpu.memory_space<vmem>>, vector<4x16x1xf32>
    tpu.vector_store %arg9[%c0_18, %c0_19, %c0_20], %25 {strides = array<i32>} : memref<4x16x1xf32, #tpu.memory_space<vmem>>, vector<4x16x1xf32>,
    %c0_21 = arith.constant 0 : index
    %c0_22 = arith.constant 0 : index
    %c0_23 = arith.constant 0 : index
    %27 = vector.load %arg7[%c0_21, %c0_22, %c0_23] : memref<4x16x16xf32, #tpu.memory_space<vmem>>, vector<4x16x16xf32>
    %28 = arith.truncf %12 : vector<4x16x128xf32> to vector<4x16x128xbf16>
    %29 = arith.truncf %14 : vector<4x16x128xf32> to vector<4x16x128xbf16>
    %cst_24 = arith.constant dense<0.000000e+00> : vector<4x16x16xf32>
    %30 = tpu.matmul %28, %29, %cst_24 {dimension_numbers = #tpu.dot_dimension_numbers<[2], [2], [1], [1], [0, 0, 0, 1, 1, 1], [0], [0]>} : vector<4x16x128xbf16>, vector<4x16x128xbf16>, vector<4x16x16xf32> -> vector<4x16x16xf32>
    %31 = arith.addf %27, %30 : vector<4x16x16xf32>
    %c0_25 = arith.constant 0 : index
    %c0_26 = arith.constant 0 : index
    %c0_27 = arith.constant 0 : index
    %32 = vector.load %arg7[%c0_25, %c0_26, %c0_27] : memref<4x16x16xf32, #tpu.memory_space<vmem>>, vector<4x16x16xf32>
    tpu.vector_store %arg7[%c0_25, %c0_26, %c0_27], %31 {strides = array<i32>} : memref<4x16x16xf32, #tpu.memory_space<vmem>>, vector<4x16x16xf32>,
    %c1_i32 = arith.constant 1 : i32
    %33 = arith.cmpi eq, %arg1, %c1_i32 : i32
    %34 = arith.extui %33 : i1 to i32
    %c0_i32_28 = arith.constant 0 : i32
    %35 = arith.cmpi ne, %34, %c0_i32_28 : i32
    scf.if %35 {
      %c0_29 = arith.constant 0 : index
      %c0_30 = arith.constant 0 : index
      %c0_31 = arith.constant 0 : index
      %36 = vector.load %arg5[%c0_29, %c0_30, %c0_31] : memref<4x1x1xf32, #tpu.memory_space<vmem>>, vector<4x1x1xf32>
      %c0_32 = arith.constant 0 : index
      %c0_33 = arith.constant 0 : index
      %c0_34 = arith.constant 0 : index
      %37 = vector.load %arg8[%c0_32, %c0_33, %c0_34] : memref<4x16x1xf32, #tpu.memory_space<vmem>>, vector<4x16x1xf32>
      %38 = math.sqrt %37 : vector<4x16x1xf32>
      %cst_35 = arith.constant 9.99999996E-13 : f32
      %39 = vector.broadcast %cst_35 : f32 to vector<4x16x1xf32>
      %40 = arith.maximumf %38, %39 : vector<4x16x1xf32>
      %41 = tpu.reciprocal %40 {approx = true} : vector<4x16x1xf32> -> vector<4x16x1xf32>
      %42 = vector.broadcast %36 : vector<4x1x1xf32> to vector<4x16x1xf32>
      %43 = arith.mulf %42, %41 : vector<4x16x1xf32>
      %c0_36 = arith.constant 0 : index
      %c0_37 = arith.constant 0 : index
      %c0_38 = arith.constant 0 : index
      %44 = vector.load %arg9[%c0_36, %c0_37, %c0_38] : memref<4x16x1xf32, #tpu.memory_space<vmem>>, vector<4x16x1xf32>
      %45 = math.sqrt %44 : vector<4x16x1xf32>
      %cst_39 = arith.constant 9.99999996E-13 : f32
      %46 = vector.broadcast %cst_39 : f32 to vector<4x16x1xf32>
      %47 = arith.maximumf %45, %46 : vector<4x16x1xf32>
      %48 = tpu.reciprocal %47 {approx = true} : vector<4x16x1xf32> -> vector<4x16x1xf32>
      %cst_40 = arith.constant dense<0.000000e+00> : vector<4x16x16xf32>
      %49 = tpu.matmul %43, %48, %cst_40 {dimension_numbers = #tpu.dot_dimension_numbers<[2], [2], [1], [1], [0, 0, 0, 1, 1, 1], [0], [0]>} : vector<4x16x1xf32>, vector<4x16x1xf32>, vector<4x16x16xf32> -> vector<4x16x16xf32>
      %c0_41 = arith.constant 0 : index
      %c0_42 = arith.constant 0 : index
      %c0_43 = arith.constant 0 : index
      %50 = vector.load %arg7[%c0_41, %c0_42, %c0_43] : memref<4x16x16xf32, #tpu.memory_space<vmem>>, vector<4x16x16xf32>
      %51 = arith.mulf %50, %49 : vector<4x16x16xf32>
      %cst_44 = arith.constant dense<0xFF800000> : vector<4x16xf32>
      %52 = vector.multi_reduction <maximumf>, %51, %cst_44 [2] : vector<4x16x16xf32> to vector<4x16xf32>
      %53 = vector.shape_cast %52 : vector<4x16xf32> to vector<4x16x1xf32>
      %54 = vector.broadcast %53 : vector<4x16x1xf32> to vector<4x16x16xf32>
      %55 = arith.subf %51, %54 : vector<4x16x16xf32>
      %56 = math.exp %55 : vector<4x16x16xf32>
      %cst_45 = arith.constant dense<0.000000e+00> : vector<4x16xf32>
      %57 = vector.multi_reduction <add>, %56, %cst_45 [2] : vector<4x16x16xf32> to vector<4x16xf32>
      %58 = vector.shape_cast %57 : vector<4x16xf32> to vector<4x16x1xf32>
      %59 = tpu.reciprocal %58 {approx = true} : vector<4x16x1xf32> -> vector<4x16x1xf32>
      %60 = vector.broadcast %59 : vector<4x16x1xf32> to vector<4x16x16xf32>
      %61 = arith.mulf %56, %60 : vector<4x16x16xf32>
      %c0_46 = arith.constant 0 : index
      %c0_47 = arith.constant 0 : index
      %c0_48 = arith.constant 0 : index
      %c0_49 = arith.constant 0 : index
      %62 = vector.load %arg6[%c0_46, %c0_47, %c0_48, %c0_49] : memref<1x4x16x16xf32, #tpu.memory_space<vmem>>, vector<1x4x16x16xf32>
      %63 = vector.shape_cast %62 : vector<1x4x16x16xf32> to vector<4x16x16xf32>
      %64 = vector.shape_cast %61 : vector<4x16x16xf32> to vector<1x4x16x16xf32>
      tpu.vector_store %arg6[%c0_46, %c0_47, %c0_48, %c0_49], %64 {strides = array<i32>} : memref<1x4x16x16xf32, #tpu.memory_space<vmem>>, vector<1x4x16x16xf32>,
    } else {
    }
    return
  }
  func.func @transform_0(%arg0: i32, %arg1: i32) -> (i32, i32, i32) {
    %c0_i32 = arith.constant 0 : i32
    %c0_i32_0 = arith.constant 0 : i32
    return %arg0, %c0_i32, %arg1 : i32, i32, i32
  }
  func.func @transform_1(%arg0: i32, %arg1: i32) -> (i32, i32) {
    %c0_i32 = arith.constant 0 : i32
    %c0_i32_0 = arith.constant 0 : i32
    %c0_i32_1 = arith.constant 0 : i32
    return %c0_i32, %c0_i32_0 : i32, i32
  }
  func.func @transform_2(%arg0: i32, %arg1: i32) -> (i32, i32) {
    %c0_i32 = arith.constant 0 : i32
    %c0_i32_0 = arith.constant 0 : i32
    %c0_i32_1 = arith.constant 0 : i32
    return %c0_i32, %c0_i32_0 : i32, i32
  }
  func.func @transform_3(%arg0: i32, %arg1: i32) -> (i32, i32, i32) {
    %c0_i32 = arith.constant 0 : i32
    %c0_i32_0 = arith.constant 0 : i32
    %c0_i32_1 = arith.constant 0 : i32
    %c0_i32_2 = arith.constant 0 : i32
    return %c0_i32, %c0_i32_0, %c0_i32_1 : i32, i32, i32
  }
  func.func @transform_4(%arg0: i32, %arg1: i32) -> (i32, i32, i32, i32) {
    %c0_i32 = arith.constant 0 : i32
    %c0_i32_0 = arith.constant 0 : i32
    %c0_i32_1 = arith.constant 0 : i32
    %c0_i32_2 = arith.constant 0 : i32
    return %arg0, %c0_i32, %c0_i32_0, %c0_i32_1 : i32, i32, i32, i32
  }
}

</mosaic_0001>

<llo_original>
// kernel: tpu_custom_call.1
$region0: #{tpu_custom_call.1}
  #allocation0 [shape = 'u32[]', space=smem, size = 0x4, offset = 0x4, fixed_abs, tag = 'smem constant byte address 0x4 - core index']
  #allocation1 [shape = 'u32[72,128]{1,0:T(1,128)}', space=vmem, size = 0x9000, scoped, tag = 'internal scratch']
  #allocation2 [shape = 'f32[4,16,16]{2,1,0:T(8,128)}', space=vmem, size = 0x8000, scoped, tag = 'scratch operand']
  #allocation3 [shape = 'f32[4,16,1]{2,1,0:T(8,128)}', space=vmem, size = 0x8000, scoped, tag = 'scratch operand']
  #allocation4 [shape = 'f32[4,16,1]{2,1,0:T(8,128)}', space=vmem, size = 0x8000, scoped, tag = 'scratch operand']
  %s0 = inlined_call_operand.hbm [shape: f32[2,64,256], index: 0, kind: input, shape index: {}]
  %s1 = inlined_call_operand.vmem [shape: bf16[128,64], index: 1, kind: input, shape index: {}]
  %s2 = inlined_call_operand.vmem [shape: f32[128,1], index: 2, kind: input, shape index: {}]
  %s3 = inlined_call_operand.vmem [shape: f32[4,1,1], index: 3, kind: input, shape index: {}]
  %s4 = inlined_call_operand.hbm [shape: f32[2,4,16,16], index: 4, kind: output, shape index: {}]
  %s5 = sld [smem:[#allocation0]]
  $region61: #{tpu_custom_call.1} parent=0
    _
  %s7 = ssub.s32 1, %s5
  %s8 = scalar_select 0, %s7, %s5
  $region1: #{tpu_custom_call.1} parent=0
    #allocation5 [shape = 'u8[65536]{0}', space=vmem, size = 0x10000, scoped, tag = 'input window, operand 0']
    #allocation6 [shape = 's32[2]{0}', space=sflag, size = 0x8, scoped, tag = 'scoped memory for tpu_custom_call.1']
    #allocation7 [shape = 's32[2]{0}', space=sflag, size = 0x8, scoped, tag = 'scoped memory for tpu_custom_call.1']
    #allocation8 [shape = 'u8[65536]{0}', space=vmem, size = 0x10000, scoped, tag = 'output window, operand 0']
    %9 = vsyncpa [#allocation6], 0
    %s10 = scalar_lea.sflag [#allocation6], 1
    %11 = vsyncpa %s10, 0
    %12 = vsyncpa [#allocation7], 0
    %s13 = scalar_lea.sflag [#allocation7], 1
    %14 = vsyncpa %s13, 0
    loop: start=0, step=1, limit=6
    $region2: #{tpu_custom_call.1} parent=1 // loop_pre_header
      _
    $region3: #{tpu_custom_call.1} parent=1 // loop_header
      %s16 = sphi 0, %s20
      %p17 = scmp.ge.s32.totalorder %s16, 6
      %s23 = sphi 0, %s35
      %s24 = sphi 0, %s31
      %s25 = sphi 0, %s23
      %s26 = sphi 0, %s24
      %s27 = sphi 0, %s25
      %s28 = sphi 0, %s26
      %s40 = sphi 0, %s42
      %s43 = sphi 0, %s40
      %s44 = sphi 0, %s43
      %s60 = sphi 0, %s44
      %s64 = sphi 0, %s64
      %s66 = sphi 0, %s64
      %s67 = sphi 0, %s66
      %s81 = sphi 0, %s67
      %s85 = sphi 0, %s85
      %s87 = sphi 0, %s85
      %s88 = sphi 0, %s87
      %s102 = sphi 0, %s88
      %s106 = sphi 0, %s106
      %s108 = sphi 0, %s106
      %s109 = sphi 0, %s108
      %s123 = sphi 0, %s109
      %s129 = sphi 0, %s131
      %s132 = sphi 0, %s129
      %s133 = sphi 0, %s132
      %s149 = sphi 0, %s133
    $region4: #{tpu_custom_call.1} parent=1 // loop_header_branch
      %19 = sbr.rel (%p17) target = $region8
    $region5: #{tpu_custom_call.1} parent=1 // loop_body
      %s21 = ssub.s32 %s16, 1
      %s22 = ssub.s32 %s16, 2
      %s29 = sadd.s32 1, %s24
      %p30 = scmp.ge.s32.totalorder %s29, 2
      %s31 = scalar_select %p30, 0, %s29
      %s32 = sadd.s32 1, %s23
      %s33 = scalar_select %p30, %s32, %s23
      %p34 = scmp.ge.s32.totalorder %s33, 2
      %s35 = scalar_select %p34, 0, %s33
      %s36 = ssub.s32 %s23, %s35
      %s37 = ssub.s32 %s24, %s31
      %s38 = sor.u32 %s36, %s37
      %p39 = scmp.eq.s32.totalorder %s38, 0
      %s41 = sadd.s32 %s40, 1
      %s42 = scalar_select %p39, %s40, %s41
      %p45 = pneg %p39
      %p46 = scmp.eq.s32.totalorder %s16, 3
      %p47 = por %p45, %p46
      %p48 = scmp.ne.s32.totalorder %s40, %s43
      %p49 = scmp.eq.s32.totalorder %s16, 0
      %p50 = por %p48, %p49
      %p51 = scmp.ne.s32.totalorder %s40, %s43
      %p52 = scmp.eq.s32.totalorder %s21, 3
      %p53 = por %p51, %p52
      %p54 = scmp.ne.s32.totalorder %s43, %s44
      %p55 = scmp.eq.s32.totalorder %s21, 0
      %p56 = por %p54, %p55
      %p57 = scmp.ne.s32.totalorder %s43, %s44
      %p58 = scmp.eq.s32.totalorder %s22, 3
      %p59 = por %p57, %p58
      %p61 = scmp.ne.s32.totalorder %s44, %s60
      %p62 = scmp.eq.s32.totalorder %s22, 0
      %p63 = por %p61, %p62
      %s65 = sadd.s32 %s64, 1
      %p68 = scmp.eq.s32.totalorder %s16, 3
      %p69 = scmp.ne.s32.totalorder %s64, %s66
      %p70 = scmp.eq.s32.totalorder %s16, 0
      %p71 = por %p69, %p70
      %p72 = scmp.ne.s32.totalorder %s64, %s66
      %p73 = scmp.eq.s32.totalorder %s21, 3
      %p74 = por %p72, %p73
      %p75 = scmp.ne.s32.totalorder %s66, %s67
      %p76 = scmp.eq.s32.totalorder %s21, 0
      %p77 = por %p75, %p76
      %p78 = scmp.ne.s32.totalorder %s66, %s67
      %p79 = scmp.eq.s32.totalorder %s22, 3
      %p80 = por %p78, %p79
      %p82 = scmp.ne.s32.totalorder %s67, %s81
      %p83 = scmp.eq.s32.totalorder %s22, 0
      %p84 = por %p82, %p83
      %s86 = sadd.s32 %s85, 1
      %p89 = scmp.eq.s32.totalorder %s16, 3
      %p90 = scmp.ne.s32.totalorder %s85, %s87
      %p91 = scmp.eq.s32.totalorder %s16, 0
      %p92 = por %p90, %p91
      %p93 = scmp.ne.s32.totalorder %s85, %s87
      %p94 = scmp.eq.s32.totalorder %s21, 3
      %p95 = por %p93, %p94
      %p96 = scmp.ne.s32.totalorder %s87, %s88
      %p97 = scmp.eq.s32.totalorder %s21, 0
      %p98 = por %p96, %p97
      %p99 = scmp.ne.s32.totalorder %s87, %s88
      %p100 = scmp.eq.s32.totalorder %s22, 3
      %p101 = por %p99, %p100
      %p103 = scmp.ne.s32.totalorder %s88, %s102
      %p104 = scmp.eq.s32.totalorder %s22, 0
      %p105 = por %p103, %p104
      %s107 = sadd.s32 %s106, 1
      %p110 = scmp.eq.s32.totalorder %s16, 3
      %p111 = scmp.ne.s32.totalorder %s106, %s108
      %p112 = scmp.eq.s32.totalorder %s16, 0
      %p113 = por %p111, %p112
      %p114 = scmp.ne.s32.totalorder %s106, %s108
      %p115 = scmp.eq.s32.totalorder %s21, 3
      %p116 = por %p114, %p115
      %p117 = scmp.ne.s32.totalorder %s108, %s109
      %p118 = scmp.eq.s32.totalorder %s21, 0
      %p119 = por %p117, %p118
      %p120 = scmp.ne.s32.totalorder %s108, %s109
      %p121 = scmp.eq.s32.totalorder %s22, 3
      %p122 = por %p120, %p121
      %p124 = scmp.ne.s32.totalorder %s109, %s123
      %p125 = scmp.eq.s32.totalorder %s22, 0
      %p126 = por %p124, %p125
      %s127 = ssub.s32 %s23, %s35
      %p128 = scmp.eq.s32.totalorder %s127, 0
      %s130 = sadd.s32 %s129, 1
      %s131 = scalar_select %p128, %s129, %s130
      %p134 = pneg %p128
      %p135 = scmp.eq.s32.totalorder %s16, 3
      %p136 = por %p134, %p135
      %p137 = scmp.ne.s32.totalorder %s129, %s132
      %p138 = scmp.eq.s32.totalorder %s16, 0
      %p139 = por %p137, %p138
      %p140 = scmp.ne.s32.totalorder %s129, %s132
      %p141 = scmp.eq.s32.totalorder %s21, 3
      %p142 = por %p140, %p141
      %p143 = scmp.ne.s32.totalorder %s132, %s133
      %p144 = scmp.eq.s32.totalorder %s21, 0
      %p145 = por %p143, %p144
      %p146 = scmp.ne.s32.totalorder %s132, %s133
      %p147 = scmp.eq.s32.totalorder %s22, 3
      %p148 = por %p146, %p147
      %p150 = scmp.ne.s32.totalorder %s133, %s149
      %p151 = scmp.eq.s32.totalorder %s22, 0
      %p152 = por %p150, %p151
      %p153 = scmp.le.s32.totalorder 1, %s16
      %p154 = scmp.lt.s32.totalorder %s16, 5
      %p155 = pnand %p153, %p154
      %p156 = pneg %p155
      // Predicated region
      $region9: #{tpu_custom_call.1} parent=5 // pred_check
        _
      $region10: #{tpu_custom_call.1} parent=5 // pred_check_branch
        %158 = sbr.rel (%p155) target = $region12
      $region11: #{tpu_custom_call.1} parent=5 // pred_region
        %s159 = ssub.s32 %s16, 1
        // Predicated region
        $region13: #{tpu_custom_call.1} parent=11 // pred_check
          %p160 = pneg %p77
        $region14: #{tpu_custom_call.1} parent=11 // pred_check_branch
          %162 = sbr.rel (%p160) target = $region16
        $region15: #{tpu_custom_call.1} parent=11 // pred_region
          _
        $region16: #{tpu_custom_call.1} parent=11 // pred_fallthru
          _
        // Predicated region
        $region17: #{tpu_custom_call.1} parent=11 // pred_check
          %p163 = pneg %p98
        $region18: #{tpu_custom_call.1} parent=11 // pred_check_branch
          %165 = sbr.rel (%p163) target = $region20
        $region19: #{tpu_custom_call.1} parent=11 // pred_region
          _
        $region20: #{tpu_custom_call.1} parent=11 // pred_fallthru
          _
        // Predicated region
        $region21: #{tpu_custom_call.1} parent=11 // pred_check
          %p166 = pneg %p119
        $region22: #{tpu_custom_call.1} parent=11 // pred_check_branch
          %168 = sbr.rel (%p166) target = $region24
        $region23: #{tpu_custom_call.1} parent=11 // pred_region
          _
        $region24: #{tpu_custom_call.1} parent=11 // pred_fallthru
          _
      $region12: #{tpu_custom_call.1} parent=5 // pred_fallthru
        _
      %p169 = scmp.lt.s32.totalorder %s16, 4
      // Predicated region
      $region25: #{tpu_custom_call.1} parent=5 // pred_check
        %p170 = pneg %p169
      $region26: #{tpu_custom_call.1} parent=5 // pred_check_branch
        %172 = sbr.rel (%p170) target = $region28
      $region27: #{tpu_custom_call.1} parent=5 // pred_region
        // Predicated region
        $region29: #{tpu_custom_call.1} parent=27 // pred_check
          %p173 = pneg %p50
        $region30: #{tpu_custom_call.1} parent=27 // pred_check_branch
          %175 = sbr.rel (%p173) target = $region32
        $region31: #{tpu_custom_call.1} parent=27 // pred_region
          %s176 = sand.u32 %s40, 1
          %s177 = scalar_lea.sflag [#allocation6], %s176
          %s178 = sand.u32 %s40, 1
          %s179 = smul.addr %s178, 64
          %s180 = scalar_lea.vmem [#allocation5], %s179
          %182 = vsyncadd %s177, 0
          %s183 = smul.addr %s23, 16
          %s184 = sadd.s32 %s24, %s183
          %s185 = smul.addr %s184, 8
          %s186 = scalar_lea.hbm %s0, %s185
          %s187 = sshll.u32 %s186, 4
          %s188 = int_to_ptr.hbm [resolvable:$true] %s187
          %s189 = sshll.u32 %s180, 4
          %s190 = int_to_ptr.vmem [resolvable:$true] %s189
          %195 = dma.hbm_to_vmem [thread:$0]  %s188, 1024, %s190, %s177, 256, 128, 8
        $region32: #{tpu_custom_call.1} parent=27 // pred_fallthru
          _
      $region28: #{tpu_custom_call.1} parent=5 // pred_fallthru
        _
      %p196 = scmp.le.s32.totalorder 1, %s16
      %p197 = scmp.lt.s32.totalorder %s16, 5
      %p198 = pnand %p196, %p197
      %p199 = pneg %p198
      // Predicated region
      $region33: #{tpu_custom_call.1} parent=5 // pred_check
        _
      $region34: #{tpu_custom_call.1} parent=5 // pred_check_branch
        %201 = sbr.rel (%p198) target = $region36
      $region35: #{tpu_custom_call.1} parent=5 // pred_region
        %s202 = ssub.s32 %s16, 1
        %s203 = sand.u32 %s43, 1
        %s204 = scalar_lea.sflag [#allocation6], %s203
        %s205 = sand.u32 %s43, 1
        %s206 = smul.addr %s205, 64
        %s207 = scalar_lea.vmem [#allocation5], %s206
        // Predicated region
        $region37: #{tpu_custom_call.1} parent=35 // pred_check
          %p208 = pneg %p56
        $region38: #{tpu_custom_call.1} parent=35 // pred_check_branch
          %210 = sbr.rel (%p208) target = $region40
        $region39: #{tpu_custom_call.1} parent=35 // pred_region
          %212 = dma.done %s204, 1024
        $region40: #{tpu_custom_call.1} parent=35 // pred_fallthru
          _
        %s213 = sand.u32 %s43, 1
        %s214 = scalar_lea.sflag [#allocation6], %s213
        %s215 = sand.u32 %s43, 1
        %s216 = smul.addr %s215, 64
        %s217 = scalar_lea.vmem [#allocation5], %s216
        %p218 = pneg %p56
        %p219 = pneg %p53
        %p220 = pneg %p77
        %p221 = pneg %p74
        %p222 = pneg %p98
        %p223 = pneg %p95
        %p224 = pneg %p119
        %p225 = pneg %p116
        %p226 = pneg %p145
        %p227 = pneg %p142
        %s228 = sand.u32 %s132, 1
        %s229 = scalar_lea.sflag [#allocation7], %s228
        %s230 = sand.u32 %s132, 1
        %s231 = smul.addr %s230, 64
        %s232 = scalar_lea.vmem [#allocation8], %s231
        %p234 = scmp.eq.s32.totalorder %s26, 0
        // Predicated region
        $region41: #{tpu_custom_call.1} parent=35 // pred_check
          %p235 = pneg %p234
        $region42: #{tpu_custom_call.1} parent=35 // pred_check_branch
          %237 = sbr.rel (%p235) target = $region44
        $region43: #{tpu_custom_call.1} parent=35 // pred_region
          %vm238 = vcmask 130048
          %239 = vst.msk [vmem:[#allocation2] sm:$0xff] %vm238, 0.0
          %240 = vst.msk [vmem:[#allocation2 + $0x8] sm:$0xff] %vm238, 0.0
          %241 = vst.msk [vmem:[#allocation2 + $0x10] sm:$0xff] %vm238, 0.0
          %242 = vst.msk [vmem:[#allocation2 + $0x18] sm:$0xff] %vm238, 0.0
          %243 = vst.msk [vmem:[#allocation2 + $0x20] sm:$0xff] %vm238, 0.0
          %244 = vst.msk [vmem:[#allocation2 + $0x28] sm:$0xff] %vm238, 0.0
          %245 = vst.msk [vmem:[#allocation2 + $0x30] sm:$0xff] %vm238, 0.0
          %246 = vst.msk [vmem:[#allocation2 + $0x38] sm:$0xff] %vm238, 0.0
          %vm247 = vcmask 7168
          %248 = vst.msk [vmem:[#allocation3] sm:$0xff] %vm247, 0.0
          %249 = vst.msk [vmem:[#allocation3 + $0x8] sm:$0xff] %vm247, 0.0
          %250 = vst.msk [vmem:[#allocation3 + $0x10] sm:$0xff] %vm247, 0.0
          %251 = vst.msk [vmem:[#allocation3 + $0x18] sm:$0xff] %vm247, 0.0
          %252 = vst.msk [vmem:[#allocation3 + $0x20] sm:$0xff] %vm247, 0.0
          %253 = vst.msk [vmem:[#allocation3 + $0x28] sm:$0xff] %vm247, 0.0
          %254 = vst.msk [vmem:[#allocation3 + $0x30] sm:$0xff] %vm247, 0.0
          %255 = vst.msk [vmem:[#allocation3 + $0x38] sm:$0xff] %vm247, 0.0
          %256 = vst.msk [vmem:[#allocation4] sm:$0xff] %vm247, 0.0
          %257 = vst.msk [vmem:[#allocation4 + $0x8] sm:$0xff] %vm247, 0.0
          %258 = vst.msk [vmem:[#allocation4 + $0x10] sm:$0xff] %vm247, 0.0
          %259 = vst.msk [vmem:[#allocation4 + $0x18] sm:$0xff] %vm247, 0.0
          %260 = vst.msk [vmem:[#allocation4 + $0x20] sm:$0xff] %vm247, 0.0
          %261 = vst.msk [vmem:[#allocation4 + $0x28] sm:$0xff] %vm247, 0.0
          %262 = vst.msk [vmem:[#allocation4 + $0x30] sm:$0xff] %vm247, 0.0
          %263 = vst.msk [vmem:[#allocation4 + $0x38] sm:$0xff] %vm247, 0.0
        $region44: #{tpu_custom_call.1} parent=35 // pred_fallthru
          _
        %v264 = vld [vmem:[%s207] sm:$0xff]
        %v265 = vld [vmem:[%s207 + $0x8] sm:$0xff]
        %v266 = vld [vmem:[%s207 + $0x10] sm:$0xff]
        %v267 = vld [vmem:[%s207 + $0x18] sm:$0xff]
        %v268 = vld [vmem:[%s207 + $0x20] sm:$0xff]
        %v269 = vld [vmem:[%s207 + $0x28] sm:$0xff]
        %v270 = vld [vmem:[%s207 + $0x30] sm:$0xff]
        %v271 = vld [vmem:[%s207 + $0x38] sm:$0xff]
        %v272 = vpack.c.bf16 %v265, %v264
        %v273 = vpack.c.bf16 %v267, %v266
        %v274 = vpack.c.bf16 %v269, %v268
        %v275 = vpack.c.bf16 %v271, %v270
        %v276 = vld [vmem:[%s1] sm:$0xf]
        %v277 = vld [vmem:[%s1 + $0x4] sm:$0xf]
        %v278 = vld [vmem:[%s1 + $0x8] sm:$0xf]
        %v279 = vld [vmem:[%s1 + $0xc] sm:$0xf]
        %v280 = vld [vmem:[%s1 + $0x10] sm:$0xf]
        %v281 = vld [vmem:[%s1 + $0x14] sm:$0xf]
        %v282 = vld [vmem:[%s1 + $0x18] sm:$0xf]
        %v283 = vld [vmem:[%s1 + $0x1c] sm:$0xf]
        %v284 = vld [vmem:[%s1 + $0x20] sm:$0xf]
        %v285 = vld [vmem:[%s1 + $0x24] sm:$0xf]
        %v286 = vld [vmem:[%s1 + $0x28] sm:$0xf]
        %v287 = vld [vmem:[%s1 + $0x2c] sm:$0xf]
        %v288 = vld [vmem:[%s1 + $0x30] sm:$0xf]
        %v289 = vld [vmem:[%s1 + $0x34] sm:$0xf]
        %v290 = vld [vmem:[%s1 + $0x38] sm:$0xf]
        %v291 = vld [vmem:[%s1 + $0x3c] sm:$0xf]
        %v292 = vld [vmem:[%s2] sm:$0xff]
        %v293 = vld [vmem:[%s2 + $0x8] sm:$0xff]
        %v294 = vld [vmem:[%s2 + $0x10] sm:$0xff]
        %v295 = vld [vmem:[%s2 + $0x18] sm:$0xff]
        %v296 = vld [vmem:[%s2 + $0x20] sm:$0xff]
        %v297 = vld [vmem:[%s2 + $0x28] sm:$0xff]
        %v298 = vld [vmem:[%s2 + $0x30] sm:$0xff]
        %v299 = vld [vmem:[%s2 + $0x38] sm:$0xff]
        %v300 = vld [vmem:[%s2 + $0x40] sm:$0xff]
        %v301 = vld [vmem:[%s2 + $0x48] sm:$0xff]
        %v302 = vld [vmem:[%s2 + $0x50] sm:$0xff]
        %v303 = vld [vmem:[%s2 + $0x58] sm:$0xff]
        %v304 = vld [vmem:[%s2 + $0x60] sm:$0xff]
        %v305 = vld [vmem:[%s2 + $0x68] sm:$0xff]
        %v306 = vld [vmem:[%s2 + $0x70] sm:$0xff]
        %v307 = vld [vmem:[%s2 + $0x78] sm:$0xff]
        %309 = vset.pattern.permute.xlu0 0
        %310 = vperm.xlu0 %309, %v292
        %v311 = vpop.permute.xlu0 %310
        %314 = vset.pattern.permute.xlu0 0
        %315 = vperm.xlu0 %314, %v293
        %v316 = vpop.permute.xlu0 %315
        %319 = vset.pattern.permute.xlu0 0
        %320 = vperm.xlu0 %319, %v294
        %v321 = vpop.permute.xlu0 %320
        %324 = vset.pattern.permute.xlu0 0
        %325 = vperm.xlu0 %324, %v295
        %v326 = vpop.permute.xlu0 %325
        %329 = vset.pattern.permute.xlu0 0
        %330 = vperm.xlu0 %329, %v296
        %v331 = vpop.permute.xlu0 %330
        %334 = vset.pattern.permute.xlu0 0
        %335 = vperm.xlu0 %334, %v297
        %v336 = vpop.permute.xlu0 %335
        %339 = vset.pattern.permute.xlu0 0
        %340 = vperm.xlu0 %339, %v298
        %v341 = vpop.permute.xlu0 %340
        %344 = vset.pattern.permute.xlu0 0
        %345 = vperm.xlu0 %344, %v299
        %v346 = vpop.permute.xlu0 %345
        %349 = vset.pattern.permute.xlu0 0
        %350 = vperm.xlu0 %349, %v300
        %v351 = vpop.permute.xlu0 %350
        %354 = vset.pattern.permute.xlu0 0
        %355 = vperm.xlu0 %354, %v301
        %v356 = vpop.permute.xlu0 %355
        %359 = vset.pattern.permute.xlu0 0
        %360 = vperm.xlu0 %359, %v302
        %v361 = vpop.permute.xlu0 %360
        %364 = vset.pattern.permute.xlu0 0
        %365 = vperm.xlu0 %364, %v303
        %v366 = vpop.permute.xlu0 %365
        %369 = vset.pattern.permute.xlu0 0
        %370 = vperm.xlu0 %369, %v304
        %v371 = vpop.permute.xlu0 %370
        %374 = vset.pattern.permute.xlu0 0
        %375 = vperm.xlu0 %374, %v305
        %v376 = vpop.permute.xlu0 %375
        %379 = vset.pattern.permute.xlu0 0
        %380 = vperm.xlu0 %379, %v306
        %v381 = vpop.permute.xlu0 %380
        %384 = vset.pattern.permute.xlu0 0
        %385 = vperm.xlu0 %384, %v307
        %v386 = vpop.permute.xlu0 %385
        %v404 = vunpack.c.l.b16 %v276
        %v405 = vunpack.c.l.b16 %v277
        %v406 = vunpack.c.l.b16 %v278
        %v407 = vunpack.c.l.b16 %v279
        %v408 = vunpack.c.l.b16 %v280
        %v409 = vunpack.c.l.b16 %v281
        %v410 = vunpack.c.l.b16 %v282
        %v411 = vunpack.c.l.b16 %v283
        %v412 = vunpack.c.l.b16 %v284
        %v413 = vunpack.c.l.b16 %v285
        %v414 = vunpack.c.l.b16 %v286
        %v415 = vunpack.c.l.b16 %v287
        %v416 = vunpack.c.l.b16 %v288
        %v417 = vunpack.c.l.b16 %v289
        %v418 = vunpack.c.l.b16 %v290
        %v419 = vunpack.c.l.b16 %v291
        %v420 = vpack.c.b16 %v405, %v404
        %v421 = vpack.c.b16 %v407, %v406
        %v422 = vpack.c.b16 %v409, %v408
        %v423 = vpack.c.b16 %v411, %v410
        %v424 = vpack.c.b16 %v413, %v412
        %v425 = vpack.c.b16 %v415, %v414
        %v426 = vpack.c.b16 %v417, %v416
        %v427 = vpack.c.b16 %v419, %v418
        %vm428 = vcmask 523264
        %v430 = vsel %vm428, %v420, 0
        %v433 = vsel %vm428, %v421, 0
        %v436 = vsel %vm428, %v422, 0
        %v439 = vsel %vm428, %v423, 0
        %v442 = vsel %vm428, %v424, 0
        %v445 = vsel %vm428, %v425, 0
        %v448 = vsel %vm428, %v426, 0
        %v451 = vsel %vm428, %v427, 0
        %453 = vmatpush.bf16.msra.mxu0 0
        %454 = vmatpush.bf16.msra.mxu0 0
        %455 = vmatpush.bf16.msra.mxu0 0
        %456 = vmatpush.bf16.msra.mxu0 0
        %457 = vmatpush.bf16.msra.mxu0 %v275
        %458 = vmatpush.bf16.msra.mxu0 %v274
        %459 = vmatpush.bf16.msra.mxu0 %v273
        %460 = vmatpush.bf16.msra.mxu0 %v272
        %461 = vmatmul.bf16.gmra.mxu0 %v430
        %v462 = vpop.f32.mrf.mxu0
        %v463 = vadd.f32 %v311, %v462
        %v464 = vpop.f32.mrf.mxu0
        %v465 = vadd.f32 %v316, %v464
        %466 = vmatmul.bf16.gmra.mxu0 %v433
        %v467 = vpop.f32.mrf.mxu0
        %v468 = vadd.f32 %v321, %v467
        %v469 = vpop.f32.mrf.mxu0
        %v470 = vadd.f32 %v326, %v469
        %471 = vmatmul.bf16.gmra.mxu0 %v436
        %v472 = vpop.f32.mrf.mxu0
        %v473 = vadd.f32 %v331, %v472
        %v474 = vpop.f32.mrf.mxu0
        %v475 = vadd.f32 %v336, %v474
        %476 = vmatmul.bf16.gmra.mxu0 %v439
        %v477 = vpop.f32.mrf.mxu0
        %v478 = vadd.f32 %v341, %v477
        %v479 = vpop.f32.mrf.mxu0
        %v480 = vadd.f32 %v346, %v479
        %481 = vmatmul.bf16.gmra.mxu0 %v442
        %v482 = vpop.f32.mrf.mxu0
        %v483 = vadd.f32 %v351, %v482
        %v484 = vpop.f32.mrf.mxu0
        %v485 = vadd.f32 %v356, %v484
        %486 = vmatmul.bf16.gmra.mxu0 %v445
        %v487 = vpop.f32.mrf.mxu0
        %v488 = vadd.f32 %v361, %v487
        %v489 = vpop.f32.mrf.mxu0
        %v490 = vadd.f32 %v366, %v489
        %491 = vmatmul.bf16.gmra.mxu0 %v448
        %v492 = vpop.f32.mrf.mxu0
        %v493 = vadd.f32 %v371, %v492
        %v494 = vpop.f32.mrf.mxu0
        %v495 = vadd.f32 %v376, %v494
        %496 = vmatmul.bf16.gmra.mxu0 %v451
        %v497 = vpop.f32.mrf.mxu0
        %v498 = vadd.f32 %v381, %v497
        %v499 = vpop.f32.mrf.mxu0
        %v500 = vadd.f32 %v386, %v499
        %501 = vdwg.mxu0
        %v502 = vld [vmem:[#allocation3] sm:$0xff]
        %v503 = vld [vmem:[#allocation3 + $0x8] sm:$0xff]
        %v504 = vld [vmem:[#allocation3 + $0x10] sm:$0xff]
        %v505 = vld [vmem:[#allocation3 + $0x18] sm:$0xff]
        %v506 = vld [vmem:[#allocation3 + $0x20] sm:$0xff]
        %v507 = vld [vmem:[#allocation3 + $0x28] sm:$0xff]
        %v508 = vld [vmem:[#allocation3 + $0x30] sm:$0xff]
        %v509 = vld [vmem:[#allocation3 + $0x38] sm:$0xff]
        %v510 = vmul.f32 %v463, %v463
        %v511 = vmul.f32 %v465, %v465
        %v512 = vmul.f32 %v468, %v468
        %v513 = vmul.f32 %v470, %v470
        %v514 = vmul.f32 %v473, %v473
        %v515 = vmul.f32 %v475, %v475
        %v516 = vmul.f32 %v478, %v478
        %v517 = vmul.f32 %v480, %v480
        %518 = vadd.xlane.f32.xlu0 %v510
        %v519 = vpop.xlane.xlu0 %518
        %520 = vadd.xlane.f32.xlu0 %v511
        %v521 = vpop.xlane.xlu0 %520
        %522 = vadd.xlane.f32.xlu0 %v512
        %v523 = vpop.xlane.xlu0 %522
        %524 = vadd.xlane.f32.xlu0 %v513
        %v525 = vpop.xlane.xlu0 %524
        %526 = vadd.xlane.f32.xlu0 %v514
        %v527 = vpop.xlane.xlu0 %526
        %528 = vadd.xlane.f32.xlu0 %v515
        %v529 = vpop.xlane.xlu0 %528
        %530 = vadd.xlane.f32.xlu0 %v516
        %v531 = vpop.xlane.xlu0 %530
        %532 = vadd.xlane.f32.xlu0 %v517
        %v533 = vpop.xlane.xlu0 %532
        %v534 = vadd.f32 %v502, %v519
        %v535 = vadd.f32 %v503, %v521
        %v536 = vadd.f32 %v504, %v523
        %v537 = vadd.f32 %v505, %v525
        %v538 = vadd.f32 %v506, %v527
        %v539 = vadd.f32 %v507, %v529
        %v540 = vadd.f32 %v508, %v531
        %v541 = vadd.f32 %v509, %v533
        %vm542 = vcmask 7168
        %543 = vst.msk [vmem:[#allocation3] sm:$0xff] %vm542, %v534
        %544 = vst.msk [vmem:[#allocation3 + $0x8] sm:$0xff] %vm542, %v535
        %545 = vst.msk [vmem:[#allocation3 + $0x10] sm:$0xff] %vm542, %v536
        %546 = vst.msk [vmem:[#allocation3 + $0x18] sm:$0xff] %vm542, %v537
        %547 = vst.msk [vmem:[#allocation3 + $0x20] sm:$0xff] %vm542, %v538
        %548 = vst.msk [vmem:[#allocation3 + $0x28] sm:$0xff] %vm542, %v539
        %549 = vst.msk [vmem:[#allocation3 + $0x30] sm:$0xff] %vm542, %v540
        %550 = vst.msk [vmem:[#allocation3 + $0x38] sm:$0xff] %vm542, %v541
        %v551 = vld [vmem:[#allocation4] sm:$0xff]
        %v552 = vld [vmem:[#allocation4 + $0x8] sm:$0xff]
        %v553 = vld [vmem:[#allocation4 + $0x10] sm:$0xff]
        %v554 = vld [vmem:[#allocation4 + $0x18] sm:$0xff]
        %v555 = vld [vmem:[#allocation4 + $0x20] sm:$0xff]
        %v556 = vld [vmem:[#allocation4 + $0x28] sm:$0xff]
        %v557 = vld [vmem:[#allocation4 + $0x30] sm:$0xff]
        %v558 = vld [vmem:[#allocation4 + $0x38] sm:$0xff]
        %v559 = vmul.f32 %v483, %v483
        %v560 = vmul.f32 %v485, %v485
        %v561 = vmul.f32 %v488, %v488
        %v562 = vmul.f32 %v490, %v490
        %v563 = vmul.f32 %v493, %v493
        %v564 = vmul.f32 %v495, %v495
        %v565 = vmul.f32 %v498, %v498
        %v566 = vmul.f32 %v500, %v500
        %567 = vadd.xlane.f32.xlu0 %v559
        %v568 = vpop.xlane.xlu0 %567
        %569 = vadd.xlane.f32.xlu0 %v560
        %v570 = vpop.xlane.xlu0 %569
        %571 = vadd.xlane.f32.xlu0 %v561
        %v572 = vpop.xlane.xlu0 %571
        %573 = vadd.xlane.f32.xlu0 %v562
        %v574 = vpop.xlane.xlu0 %573
        %575 = vadd.xlane.f32.xlu0 %v563
        %v576 = vpop.xlane.xlu0 %575
        %577 = vadd.xlane.f32.xlu0 %v564
        %v578 = vpop.xlane.xlu0 %577
        %579 = vadd.xlane.f32.xlu0 %v565
        %v580 = vpop.xlane.xlu0 %579
        %581 = vadd.xlane.f32.xlu0 %v566
        %v582 = vpop.xlane.xlu0 %581
        %v583 = vadd.f32 %v551, %v568
        %v584 = vadd.f32 %v552, %v570
        %v585 = vadd.f32 %v553, %v572
        %v586 = vadd.f32 %v554, %v574
        %v587 = vadd.f32 %v555, %v576
        %v588 = vadd.f32 %v556, %v578
        %v589 = vadd.f32 %v557, %v580
        %v590 = vadd.f32 %v558, %v582
        %591 = vst.msk [vmem:[#allocation4] sm:$0xff] %vm542, %v583
        %592 = vst.msk [vmem:[#allocation4 + $0x8] sm:$0xff] %vm542, %v584
        %593 = vst.msk [vmem:[#allocation4 + $0x10] sm:$0xff] %vm542, %v585
        %594 = vst.msk [vmem:[#allocation4 + $0x18] sm:$0xff] %vm542, %v586
        %595 = vst.msk [vmem:[#allocation4 + $0x20] sm:$0xff] %vm542, %v587
        %596 = vst.msk [vmem:[#allocation4 + $0x28] sm:$0xff] %vm542, %v588
        %597 = vst.msk [vmem:[#allocation4 + $0x30] sm:$0xff] %vm542, %v589
        %598 = vst.msk [vmem:[#allocation4 + $0x38] sm:$0xff] %vm542, %v590
        %v599 = vld [vmem:[#allocation2] sm:$0xff]
        %v600 = vld [vmem:[#allocation2 + $0x8] sm:$0xff]
        %v601 = vld [vmem:[#allocation2 + $0x10] sm:$0xff]
        %v602 = vld [vmem:[#allocation2 + $0x18] sm:$0xff]
        %v603 = vld [vmem:[#allocation2 + $0x20] sm:$0xff]
        %v604 = vld [vmem:[#allocation2 + $0x28] sm:$0xff]
        %v605 = vld [vmem:[#allocation2 + $0x30] sm:$0xff]
        %v606 = vld [vmem:[#allocation2 + $0x38] sm:$0xff]
        %v607 = vpack.c.bf16 %v463, %v463
        %v608 = vpack.c.bf16 %v465, %v465
        %v609 = vpack.c.bf16 %v468, %v468
        %v610 = vpack.c.bf16 %v470, %v470
        %v611 = vpack.c.bf16 %v473, %v473
        %v612 = vpack.c.bf16 %v475, %v475
        %v613 = vpack.c.bf16 %v478, %v478
        %v614 = vpack.c.bf16 %v480, %v480
        %v615 = vpack.c.bf16 %v483, %v483
        %v616 = vpack.c.bf16 %v485, %v485
        %v617 = vpack.c.bf16 %v488, %v488
        %v618 = vpack.c.bf16 %v490, %v490
        %v619 = vpack.c.bf16 %v493, %v493
        %v620 = vpack.c.bf16 %v495, %v495
        %v621 = vpack.c.bf16 %v498, %v498
        %v622 = vpack.c.bf16 %v500, %v500
        %v625 = vunpack.c.l.b16 %v607
        %v626 = vunpack.c.l.b16 %v608
        %v627 = vpack.c.b16 %v626, %v625
        %v631 = vunpack.c.l.b16 %v615
        %v632 = vunpack.c.l.b16 %v616
        %v633 = vpack.c.b16 %v632, %v631
        %635 = vmatpush.bf16.xpose.msra.mxu0 0
        %636 = vmatpush.bf16.xpose.msra.mxu0 0
        %637 = vmatpush.bf16.xpose.msra.mxu0 0
        %638 = vmatpush.bf16.xpose.msra.mxu0 0
        %639 = vmatpush.bf16.xpose.msra.mxu0 0
        %640 = vmatpush.bf16.xpose.msra.mxu0 0
        %641 = vmatpush.bf16.xpose.msra.mxu0 0
        %642 = vmatpush.bf16.xpose.msra.mxu0 %v633
        %643 = vmatmul.bf16.gmra.mxu0 %v627
        %v644 = vpop.f32.mrf.mxu0
        %v645 = vadd.f32 0.0, %v644
        %v646 = vpop.f32.mrf.mxu0
        %v647 = vadd.f32 0.0, %v646
        %648 = vdwg.mxu0
        %v651 = vunpack.c.l.b16 %v609
        %v652 = vunpack.c.l.b16 %v610
        %v653 = vpack.c.b16 %v652, %v651
        %v657 = vunpack.c.l.b16 %v617
        %v658 = vunpack.c.l.b16 %v618
        %v659 = vpack.c.b16 %v658, %v657
        %661 = vmatpush.bf16.xpose.msra.mxu0 0
        %662 = vmatpush.bf16.xpose.msra.mxu0 0
        %663 = vmatpush.bf16.xpose.msra.mxu0 0
        %664 = vmatpush.bf16.xpose.msra.mxu0 0
        %665 = vmatpush.bf16.xpose.msra.mxu0 0
        %666 = vmatpush.bf16.xpose.msra.mxu0 0
        %667 = vmatpush.bf16.xpose.msra.mxu0 0
        %668 = vmatpush.bf16.xpose.msra.mxu0 %v659
        %669 = vmatmul.bf16.gmra.mxu0 %v653
        %v670 = vpop.f32.mrf.mxu0
        %v671 = vadd.f32 0.0, %v670
        %v672 = vpop.f32.mrf.mxu0
        %v673 = vadd.f32 0.0, %v672
        %674 = vdwg.mxu0
        %v677 = vunpack.c.l.b16 %v611
        %v678 = vunpack.c.l.b16 %v612
        %v679 = vpack.c.b16 %v678, %v677
        %v683 = vunpack.c.l.b16 %v619
        %v684 = vunpack.c.l.b16 %v620
        %v685 = vpack.c.b16 %v684, %v683
        %687 = vmatpush.bf16.xpose.msra.mxu0 0
        %688 = vmatpush.bf16.xpose.msra.mxu0 0
        %689 = vmatpush.bf16.xpose.msra.mxu0 0
        %690 = vmatpush.bf16.xpose.msra.mxu0 0
        %691 = vmatpush.bf16.xpose.msra.mxu0 0
        %692 = vmatpush.bf16.xpose.msra.mxu0 0
        %693 = vmatpush.bf16.xpose.msra.mxu0 0
        %694 = vmatpush.bf16.xpose.msra.mxu0 %v685
        %695 = vmatmul.bf16.gmra.mxu0 %v679
        %v696 = vpop.f32.mrf.mxu0
        %v697 = vadd.f32 0.0, %v696
        %v698 = vpop.f32.mrf.mxu0
        %v699 = vadd.f32 0.0, %v698
        %700 = vdwg.mxu0
        %v703 = vunpack.c.l.b16 %v613
        %v704 = vunpack.c.l.b16 %v614
        %v705 = vpack.c.b16 %v704, %v703
        %v709 = vunpack.c.l.b16 %v621
        %v710 = vunpack.c.l.b16 %v622
        %v711 = vpack.c.b16 %v710, %v709
        %713 = vmatpush.bf16.xpose.msra.mxu0 0
        %714 = vmatpush.bf16.xpose.msra.mxu0 0
        %715 = vmatpush.bf16.xpose.msra.mxu0 0
        %716 = vmatpush.bf16.xpose.msra.mxu0 0
        %717 = vmatpush.bf16.xpose.msra.mxu0 0
        %718 = vmatpush.bf16.xpose.msra.mxu0 0
        %719 = vmatpush.bf16.xpose.msra.mxu0 0
        %720 = vmatpush.bf16.xpose.msra.mxu0 %v711
        %721 = vmatmul.bf16.gmra.mxu0 %v705
        %v722 = vpop.f32.mrf.mxu0
        %v723 = vadd.f32 0.0, %v722
        %v724 = vpop.f32.mrf.mxu0
        %v725 = vadd.f32 0.0, %v724
        %726 = vdwg.mxu0
        %v727 = vadd.f32 %v599, %v645
        %v728 = vadd.f32 %v600, %v647
        %v729 = vadd.f32 %v601, %v671
        %v730 = vadd.f32 %v602, %v673
        %v731 = vadd.f32 %v603, %v697
        %v732 = vadd.f32 %v604, %v699
        %v733 = vadd.f32 %v605, %v723
        %v734 = vadd.f32 %v606, %v725
        %vm735 = vcmask 130048
        %736 = vst.msk [vmem:[#allocation2] sm:$0xff] %vm735, %v727
        %737 = vst.msk [vmem:[#allocation2 + $0x8] sm:$0xff] %vm735, %v728
        %738 = vst.msk [vmem:[#allocation2 + $0x10] sm:$0xff] %vm735, %v729
        %739 = vst.msk [vmem:[#allocation2 + $0x18] sm:$0xff] %vm735, %v730
        %740 = vst.msk [vmem:[#allocation2 + $0x20] sm:$0xff] %vm735, %v731
        %741 = vst.msk [vmem:[#allocation2 + $0x28] sm:$0xff] %vm735, %v732
        %742 = vst.msk [vmem:[#allocation2 + $0x30] sm:$0xff] %vm735, %v733
        %743 = vst.msk [vmem:[#allocation2 + $0x38] sm:$0xff] %vm735, %v734
        %p744 = scmp.eq.s32.totalorder %s26, 1
        // Predicated region
        $region45: #{tpu_custom_call.1} parent=35 // pred_check
          %p745 = pneg %p744
        $region46: #{tpu_custom_call.1} parent=35 // pred_check_branch
          %747 = sbr.rel (%p745) target = $region48
        $region47: #{tpu_custom_call.1} parent=35 // pred_region
          %v748 = vld [vmem:[%s3] sm:$0x1]
          %v749 = vld [vmem:[%s3 + $0x1] sm:$0x1]
          %v750 = vld [vmem:[%s3 + $0x2] sm:$0x1]
          %v751 = vld [vmem:[%s3 + $0x3] sm:$0x1]
          %v752 = vld [vmem:[#allocation3] sm:$0xff]
          %v753 = vld [vmem:[#allocation3 + $0x8] sm:$0xff]
          %v754 = vld [vmem:[#allocation3 + $0x10] sm:$0xff]
          %v755 = vld [vmem:[#allocation3 + $0x18] sm:$0xff]
          %v756 = vld [vmem:[#allocation3 + $0x20] sm:$0xff]
          %v757 = vld [vmem:[#allocation3 + $0x28] sm:$0xff]
          %v758 = vld [vmem:[#allocation3 + $0x30] sm:$0xff]
          %v759 = vld [vmem:[#allocation3 + $0x38] sm:$0xff]
          %v760 = vrsqrt.pop %v752
          %v761 = vmul.f32 %v760, %v752
          %v762 = vmul.f32 %v761, %v760
          %v763 = vmul.f32 0.5, %v762
          %v764 = vsub.f32 1.5, %v763
          %v765 = vmul.f32 %v760, %v764
          %v766 = vmul.f32 %v752, %v765
          %vm767 = vcmp.eq.f32.partialorder %v752, inf
          %v768 = vsel %vm767, %v752, %v766
          %vm769 = vcmp.eq.f32.partialorder %v752, 0.0
          %v770 = vand.u32 %v752, 2147483648
          %v771 = vsel %vm769, %v770, %v768
          %v772 = vrsqrt.pop %v753
          %v773 = vmul.f32 %v772, %v753
          %v774 = vmul.f32 %v773, %v772
          %v775 = vmul.f32 0.5, %v774
          %v776 = vsub.f32 1.5, %v775
          %v777 = vmul.f32 %v772, %v776
          %v778 = vmul.f32 %v753, %v777
          %vm779 = vcmp.eq.f32.partialorder %v753, inf
          %v780 = vsel %vm779, %v753, %v778
          %vm781 = vcmp.eq.f32.partialorder %v753, 0.0
          %v782 = vand.u32 %v753, 2147483648
          %v783 = vsel %vm781, %v782, %v780
          %v784 = vrsqrt.pop %v754
          %v785 = vmul.f32 %v784, %v754
          %v786 = vmul.f32 %v785, %v784
          %v787 = vmul.f32 0.5, %v786
          %v788 = vsub.f32 1.5, %v787
          %v789 = vmul.f32 %v784, %v788
          %v790 = vmul.f32 %v754, %v789
          %vm791 = vcmp.eq.f32.partialorder %v754, inf
          %v792 = vsel %vm791, %v754, %v790
          %vm793 = vcmp.eq.f32.partialorder %v754, 0.0
          %v794 = vand.u32 %v754, 2147483648
          %v795 = vsel %vm793, %v794, %v792
          %v796 = vrsqrt.pop %v755
          %v797 = vmul.f32 %v796, %v755
          %v798 = vmul.f32 %v797, %v796
          %v799 = vmul.f32 0.5, %v798
          %v800 = vsub.f32 1.5, %v799
          %v801 = vmul.f32 %v796, %v800
          %v802 = vmul.f32 %v755, %v801
          %vm803 = vcmp.eq.f32.partialorder %v755, inf
          %v804 = vsel %vm803, %v755, %v802
          %vm805 = vcmp.eq.f32.partialorder %v755, 0.0
          %v806 = vand.u32 %v755, 2147483648
          %v807 = vsel %vm805, %v806, %v804
          %v808 = vrsqrt.pop %v756
          %v809 = vmul.f32 %v808, %v756
          %v810 = vmul.f32 %v809, %v808
          %v811 = vmul.f32 0.5, %v810
          %v812 = vsub.f32 1.5, %v811
          %v813 = vmul.f32 %v808, %v812
          %v814 = vmul.f32 %v756, %v813
          %vm815 = vcmp.eq.f32.partialorder %v756, inf
          %v816 = vsel %vm815, %v756, %v814
          %vm817 = vcmp.eq.f32.partialorder %v756, 0.0
          %v818 = vand.u32 %v756, 2147483648
          %v819 = vsel %vm817, %v818, %v816
          %v820 = vrsqrt.pop %v757
          %v821 = vmul.f32 %v820, %v757
          %v822 = vmul.f32 %v821, %v820
          %v823 = vmul.f32 0.5, %v822
          %v824 = vsub.f32 1.5, %v823
          %v825 = vmul.f32 %v820, %v824
          %v826 = vmul.f32 %v757, %v825
          %vm827 = vcmp.eq.f32.partialorder %v757, inf
          %v828 = vsel %vm827, %v757, %v826
          %vm829 = vcmp.eq.f32.partialorder %v757, 0.0
          %v830 = vand.u32 %v757, 2147483648
          %v831 = vsel %vm829, %v830, %v828
          %v832 = vrsqrt.pop %v758
          %v833 = vmul.f32 %v832, %v758
          %v834 = vmul.f32 %v833, %v832
          %v835 = vmul.f32 0.5, %v834
          %v836 = vsub.f32 1.5, %v835
          %v837 = vmul.f32 %v832, %v836
          %v838 = vmul.f32 %v758, %v837
          %vm839 = vcmp.eq.f32.partialorder %v758, inf
          %v840 = vsel %vm839, %v758, %v838
          %vm841 = vcmp.eq.f32.partialorder %v758, 0.0
          %v842 = vand.u32 %v758, 2147483648
          %v843 = vsel %vm841, %v842, %v840
          %v844 = vrsqrt.pop %v759
          %v845 = vmul.f32 %v844, %v759
          %v846 = vmul.f32 %v845, %v844
          %v847 = vmul.f32 0.5, %v846
          %v848 = vsub.f32 1.5, %v847
          %v849 = vmul.f32 %v844, %v848
          %v850 = vmul.f32 %v759, %v849
          %vm851 = vcmp.eq.f32.partialorder %v759, inf
          %v852 = vsel %vm851, %v759, %v850
          %vm853 = vcmp.eq.f32.partialorder %v759, 0.0
          %v854 = vand.u32 %v759, 2147483648
          %v855 = vsel %vm853, %v854, %v852
          %v856 = vmax.f32 %v771, 1e-12
          %v857 = vmax.f32 %v783, 1e-12
          %v858 = vmax.f32 %v795, 1e-12
          %v859 = vmax.f32 %v807, 1e-12
          %v860 = vmax.f32 %v819, 1e-12
          %v861 = vmax.f32 %v831, 1e-12
          %v862 = vmax.f32 %v843, 1e-12
          %v863 = vmax.f32 %v855, 1e-12
          %v864 = vrcp.pop %v856
          %v865 = vrcp.pop %v857
          %v866 = vrcp.pop %v858
          %v867 = vrcp.pop %v859
          %v868 = vrcp.pop %v860
          %v869 = vrcp.pop %v861
          %v870 = vrcp.pop %v862
          %v871 = vrcp.pop %v863
          %v876 = vperm.slane %v748, 0
          %v877 = vperm.slane %v749, 0
          %v878 = vperm.slane %v750, 0
          %v879 = vperm.slane %v751, 0
          %v884 = vmul.f32 %v876, %v864
          %v885 = vmul.f32 %v876, %v865
          %v886 = vmul.f32 %v877, %v866
          %v887 = vmul.f32 %v877, %v867
          %v888 = vmul.f32 %v878, %v868
          %v889 = vmul.f32 %v878, %v869
          %v890 = vmul.f32 %v879, %v870
          %v891 = vmul.f32 %v879, %v871
          %v892 = vld [vmem:[#allocation4] sm:$0xff]
          %v893 = vld [vmem:[#allocation4 + $0x8] sm:$0xff]
          %v894 = vld [vmem:[#allocation4 + $0x10] sm:$0xff]
          %v895 = vld [vmem:[#allocation4 + $0x18] sm:$0xff]
          %v896 = vld [vmem:[#allocation4 + $0x20] sm:$0xff]
          %v897 = vld [vmem:[#allocation4 + $0x28] sm:$0xff]
          %v898 = vld [vmem:[#allocation4 + $0x30] sm:$0xff]
          %v899 = vld [vmem:[#allocation4 + $0x38] sm:$0xff]
          %v900 = vrsqrt.pop %v892
          %v901 = vmul.f32 %v900, %v892
          %v902 = vmul.f32 %v901, %v900
          %v903 = vmul.f32 0.5, %v902
          %v904 = vsub.f32 1.5, %v903
          %v905 = vmul.f32 %v900, %v904
          %v906 = vmul.f32 %v892, %v905
          %vm907 = vcmp.eq.f32.partialorder %v892, inf
          %v908 = vsel %vm907, %v892, %v906
          %vm909 = vcmp.eq.f32.partialorder %v892, 0.0
          %v910 = vand.u32 %v892, 2147483648
          %v911 = vsel %vm909, %v910, %v908
          %v912 = vrsqrt.pop %v893
          %v913 = vmul.f32 %v912, %v893
          %v914 = vmul.f32 %v913, %v912
          %v915 = vmul.f32 0.5, %v914
          %v916 = vsub.f32 1.5, %v915
          %v917 = vmul.f32 %v912, %v916
          %v918 = vmul.f32 %v893, %v917
          %vm919 = vcmp.eq.f32.partialorder %v893, inf
          %v920 = vsel %vm919, %v893, %v918
          %vm921 = vcmp.eq.f32.partialorder %v893, 0.0
          %v922 = vand.u32 %v893, 2147483648
          %v923 = vsel %vm921, %v922, %v920
          %v924 = vrsqrt.pop %v894
          %v925 = vmul.f32 %v924, %v894
          %v926 = vmul.f32 %v925, %v924
          %v927 = vmul.f32 0.5, %v926
          %v928 = vsub.f32 1.5, %v927
          %v929 = vmul.f32 %v924, %v928
          %v930 = vmul.f32 %v894, %v929
          %vm931 = vcmp.eq.f32.partialorder %v894, inf
          %v932 = vsel %vm931, %v894, %v930
          %vm933 = vcmp.eq.f32.partialorder %v894, 0.0
          %v934 = vand.u32 %v894, 2147483648
          %v935 = vsel %vm933, %v934, %v932
          %v936 = vrsqrt.pop %v895
          %v937 = vmul.f32 %v936, %v895
          %v938 = vmul.f32 %v937, %v936
          %v939 = vmul.f32 0.5, %v938
          %v940 = vsub.f32 1.5, %v939
          %v941 = vmul.f32 %v936, %v940
          %v942 = vmul.f32 %v895, %v941
          %vm943 = vcmp.eq.f32.partialorder %v895, inf
          %v944 = vsel %vm943, %v895, %v942
          %vm945 = vcmp.eq.f32.partialorder %v895, 0.0
          %v946 = vand.u32 %v895, 2147483648
          %v947 = vsel %vm945, %v946, %v944
          %v948 = vrsqrt.pop %v896
          %v949 = vmul.f32 %v948, %v896
          %v950 = vmul.f32 %v949, %v948
          %v951 = vmul.f32 0.5, %v950
          %v952 = vsub.f32 1.5, %v951
          %v953 = vmul.f32 %v948, %v952
          %v954 = vmul.f32 %v896, %v953
          %vm955 = vcmp.eq.f32.partialorder %v896, inf
          %v956 = vsel %vm955, %v896, %v954
          %vm957 = vcmp.eq.f32.partialorder %v896, 0.0
          %v958 = vand.u32 %v896, 2147483648
          %v959 = vsel %vm957, %v958, %v956
          %v960 = vrsqrt.pop %v897
          %v961 = vmul.f32 %v960, %v897
          %v962 = vmul.f32 %v961, %v960
          %v963 = vmul.f32 0.5, %v962
          %v964 = vsub.f32 1.5, %v963
          %v965 = vmul.f32 %v960, %v964
          %v966 = vmul.f32 %v897, %v965
          %vm967 = vcmp.eq.f32.partialorder %v897, inf
          %v968 = vsel %vm967, %v897, %v966
          %vm969 = vcmp.eq.f32.partialorder %v897, 0.0
          %v970 = vand.u32 %v897, 2147483648
          %v971 = vsel %vm969, %v970, %v968
          %v972 = vrsqrt.pop %v898
          %v973 = vmul.f32 %v972, %v898
          %v974 = vmul.f32 %v973, %v972
          %v975 = vmul.f32 0.5, %v974
          %v976 = vsub.f32 1.5, %v975
          %v977 = vmul.f32 %v972, %v976
          %v978 = vmul.f32 %v898, %v977
          %vm979 = vcmp.eq.f32.partialorder %v898, inf
          %v980 = vsel %vm979, %v898, %v978
          %vm981 = vcmp.eq.f32.partialorder %v898, 0.0
          %v982 = vand.u32 %v898, 2147483648
          %v983 = vsel %vm981, %v982, %v980
          %v984 = vrsqrt.pop %v899
          %v985 = vmul.f32 %v984, %v899
          %v986 = vmul.f32 %v985, %v984
          %v987 = vmul.f32 0.5, %v986
          %v988 = vsub.f32 1.5, %v987
          %v989 = vmul.f32 %v984, %v988
          %v990 = vmul.f32 %v899, %v989
          %vm991 = vcmp.eq.f32.partialorder %v899, inf
          %v992 = vsel %vm991, %v899, %v990
          %vm993 = vcmp.eq.f32.partialorder %v899, 0.0
          %v994 = vand.u32 %v899, 2147483648
          %v995 = vsel %vm993, %v994, %v992
          %v996 = vmax.f32 %v911, 1e-12
          %v997 = vmax.f32 %v923, 1e-12
          %v998 = vmax.f32 %v935, 1e-12
          %v999 = vmax.f32 %v947, 1e-12
          %v1000 = vmax.f32 %v959, 1e-12
          %v1001 = vmax.f32 %v971, 1e-12
          %v1002 = vmax.f32 %v983, 1e-12
          %v1003 = vmax.f32 %v995, 1e-12
          %v1004 = vrcp.pop %v996
          %v1005 = vrcp.pop %v997
          %v1006 = vrcp.pop %v998
          %v1007 = vrcp.pop %v999
          %v1008 = vrcp.pop %v1000
          %v1009 = vrcp.pop %v1001
          %v1010 = vrcp.pop %v1002
          %v1011 = vrcp.pop %v1003
          %v1013 = vsel %vm542, %v884, 0
          %v1016 = vsel %vm542, %v885, 0
          %v1019 = vsel %vm542, %v1004, 0
          %v1022 = vsel %vm542, %v1005, 0
          %1024 = vmatpush.xpose.msra.mxu0 0.0
          %1025 = vmatpush.xpose.msra.mxu0 0.0
          %1026 = vmatpush.xpose.msra.mxu0 0.0
          %1027 = vmatpush.xpose.msra.mxu0 0.0
          %1028 = vmatpush.xpose.msra.mxu0 0.0
          %1029 = vmatpush.xpose.msra.mxu0 0.0
          %1030 = vmatpush.xpose.msra.mxu0 0.0
          %1031 = vmatpush.xpose.msra.mxu0 0.0
          %1032 = vmatpush.xpose.msra.mxu0 0.0
          %1033 = vmatpush.xpose.msra.mxu0 0.0
          %1034 = vmatpush.xpose.msra.mxu0 0.0
          %1035 = vmatpush.xpose.msra.mxu0 0.0
          %1036 = vmatpush.xpose.msra.mxu0 0.0
          %1037 = vmatpush.xpose.msra.mxu0 0.0
          %1038 = vmatpush.xpose.msra.mxu0 %v1022
          %1039 = vmatpush.xpose.msra.mxu0 %v1019
          %1040 = vmatmul.f32.gmra.mxu0 %v1013
          %v1041 = vpop.f32.mrf.mxu0
          %v1042 = vadd.f32 0.0, %v1041
          %1043 = vmatmul.f32.gmra.mxu0 %v1016
          %v1044 = vpop.f32.mrf.mxu0
          %v1045 = vadd.f32 0.0, %v1044
          %1046 = vdwg.mxu0
          %v1048 = vsel %vm542, %v886, 0
          %v1051 = vsel %vm542, %v887, 0
          %v1054 = vsel %vm542, %v1006, 0
          %v1057 = vsel %vm542, %v1007, 0
          %1059 = vmatpush.xpose.msra.mxu0 0.0
          %1060 = vmatpush.xpose.msra.mxu0 0.0
          %1061 = vmatpush.xpose.msra.mxu0 0.0
          %1062 = vmatpush.xpose.msra.mxu0 0.0
          %1063 = vmatpush.xpose.msra.mxu0 0.0
          %1064 = vmatpush.xpose.msra.mxu0 0.0
          %1065 = vmatpush.xpose.msra.mxu0 0.0
          %1066 = vmatpush.xpose.msra.mxu0 0.0
          %1067 = vmatpush.xpose.msra.mxu0 0.0
          %1068 = vmatpush.xpose.msra.mxu0 0.0
          %1069 = vmatpush.xpose.msra.mxu0 0.0
          %1070 = vmatpush.xpose.msra.mxu0 0.0
          %1071 = vmatpush.xpose.msra.mxu0 0.0
          %1072 = vmatpush.xpose.msra.mxu0 0.0
          %1073 = vmatpush.xpose.msra.mxu0 %v1057
          %1074 = vmatpush.xpose.msra.mxu0 %v1054
          %1075 = vmatmul.f32.gmra.mxu0 %v1048
          %v1076 = vpop.f32.mrf.mxu0
          %v1077 = vadd.f32 0.0, %v1076
          %1078 = vmatmul.f32.gmra.mxu0 %v1051
          %v1079 = vpop.f32.mrf.mxu0
          %v1080 = vadd.f32 0.0, %v1079
          %1081 = vdwg.mxu0
          %v1083 = vsel %vm542, %v888, 0
          %v1086 = vsel %vm542, %v889, 0
          %v1089 = vsel %vm542, %v1008, 0
          %v1092 = vsel %vm542, %v1009, 0
          %1094 = vmatpush.xpose.msra.mxu0 0.0
          %1095 = vmatpush.xpose.msra.mxu0 0.0
          %1096 = vmatpush.xpose.msra.mxu0 0.0
          %1097 = vmatpush.xpose.msra.mxu0 0.0
          %1098 = vmatpush.xpose.msra.mxu0 0.0
          %1099 = vmatpush.xpose.msra.mxu0 0.0
          %1100 = vmatpush.xpose.msra.mxu0 0.0
          %1101 = vmatpush.xpose.msra.mxu0 0.0
          %1102 = vmatpush.xpose.msra.mxu0 0.0
          %1103 = vmatpush.xpose.msra.mxu0 0.0
          %1104 = vmatpush.xpose.msra.mxu0 0.0
          %1105 = vmatpush.xpose.msra.mxu0 0.0
          %1106 = vmatpush.xpose.msra.mxu0 0.0
          %1107 = vmatpush.xpose.msra.mxu0 0.0
          %1108 = vmatpush.xpose.msra.mxu0 %v1092
          %1109 = vmatpush.xpose.msra.mxu0 %v1089
          %1110 = vmatmul.f32.gmra.mxu0 %v1083
          %v1111 = vpop.f32.mrf.mxu0
          %v1112 = vadd.f32 0.0, %v1111
          %1113 = vmatmul.f32.gmra.mxu0 %v1086
          %v1114 = vpop.f32.mrf.mxu0
          %v1115 = vadd.f32 0.0, %v1114
          %1116 = vdwg.mxu0
          %v1118 = vsel %vm542, %v890, 0
          %v1121 = vsel %vm542, %v891, 0
          %v1124 = vsel %vm542, %v1010, 0
          %v1127 = vsel %vm542, %v1011, 0
          %1129 = vmatpush.xpose.msra.mxu0 0.0
          %1130 = vmatpush.xpose.msra.mxu0 0.0
          %1131 = vmatpush.xpose.msra.mxu0 0.0
          %1132 = vmatpush.xpose.msra.mxu0 0.0
          %1133 = vmatpush.xpose.msra.mxu0 0.0
          %1134 = vmatpush.xpose.msra.mxu0 0.0
          %1135 = vmatpush.xpose.msra.mxu0 0.0
          %1136 = vmatpush.xpose.msra.mxu0 0.0
          %1137 = vmatpush.xpose.msra.mxu0 0.0
          %1138 = vmatpush.xpose.msra.mxu0 0.0
          %1139 = vmatpush.xpose.msra.mxu0 0.0
          %1140 = vmatpush.xpose.msra.mxu0 0.0
          %1141 = vmatpush.xpose.msra.mxu0 0.0
          %1142 = vmatpush.xpose.msra.mxu0 0.0
          %1143 = vmatpush.xpose.msra.mxu0 %v1127
          %1144 = vmatpush.xpose.msra.mxu0 %v1124
          %1145 = vmatmul.f32.gmra.mxu0 %v1118
          %v1146 = vpop.f32.mrf.mxu0
          %v1147 = vadd.f32 0.0, %v1146
          %1148 = vmatmul.f32.gmra.mxu0 %v1121
          %v1149 = vpop.f32.mrf.mxu0
          %v1150 = vadd.f32 0.0, %v1149
          %1151 = vdwg.mxu0
          %v1152 = vld [vmem:[#allocation2] sm:$0xff]
          %v1153 = vld [vmem:[#allocation2 + $0x8] sm:$0xff]
          %v1154 = vld [vmem:[#allocation2 + $0x10] sm:$0xff]
          %v1155 = vld [vmem:[#allocation2 + $0x18] sm:$0xff]
          %v1156 = vld [vmem:[#allocation2 + $0x20] sm:$0xff]
          %v1157 = vld [vmem:[#allocation2 + $0x28] sm:$0xff]
          %v1158 = vld [vmem:[#allocation2 + $0x30] sm:$0xff]
          %v1159 = vld [vmem:[#allocation2 + $0x38] sm:$0xff]
          %v1160 = vmul.f32 %v1152, %v1042
          %v1161 = vmul.f32 %v1153, %v1045
          %v1162 = vmul.f32 %v1154, %v1077
          %v1163 = vmul.f32 %v1155, %v1080
          %v1164 = vmul.f32 %v1156, %v1112
          %v1165 = vmul.f32 %v1157, %v1115
          %v1166 = vmul.f32 %v1158, %v1147
          %v1167 = vmul.f32 %v1159, %v1150
          %v1168 = vsel %vm735, %v1160, -inf
          %1169 = vmax.xlane.f32.xlu0 %v1168
          %v1170 = vpop.xlane.xlu0 %1169
          %v1171 = vsel %vm735, %v1161, -inf
          %1172 = vmax.xlane.f32.xlu0 %v1171
          %v1173 = vpop.xlane.xlu0 %1172
          %v1174 = vsel %vm735, %v1162, -inf
          %1175 = vmax.xlane.f32.xlu0 %v1174
          %v1176 = vpop.xlane.xlu0 %1175
          %v1177 = vsel %vm735, %v1163, -inf
          %1178 = vmax.xlane.f32.xlu0 %v1177
          %v1179 = vpop.xlane.xlu0 %1178
          %v1180 = vsel %vm735, %v1164, -inf
          %1181 = vmax.xlane.f32.xlu0 %v1180
          %v1182 = vpop.xlane.xlu0 %1181
          %v1183 = vsel %vm735, %v1165, -inf
          %1184 = vmax.xlane.f32.xlu0 %v1183
          %v1185 = vpop.xlane.xlu0 %1184
          %v1186 = vsel %vm735, %v1166, -inf
          %1187 = vmax.xlane.f32.xlu0 %v1186
          %v1188 = vpop.xlane.xlu0 %1187
          %v1189 = vsel %vm735, %v1167, -inf
          %1190 = vmax.xlane.f32.xlu0 %v1189
          %v1191 = vpop.xlane.xlu0 %1190
          %v1192 = vsub.f32 %v1160, %v1170
          %v1193 = vsub.f32 %v1161, %v1173
          %v1194 = vsub.f32 %v1162, %v1176
          %v1195 = vsub.f32 %v1163, %v1179
          %v1196 = vsub.f32 %v1164, %v1182
          %v1197 = vsub.f32 %v1165, %v1185
          %v1198 = vsub.f32 %v1166, %v1188
          %v1199 = vsub.f32 %v1167, %v1191
          %v1200 = vmul.f32 %v1192, 1.442695
          %v1201 = vpow.pop %v1200
          %v1202 = vmul.f32 %v1193, 1.442695
          %v1203 = vpow.pop %v1202
          %v1204 = vmul.f32 %v1194, 1.442695
          %v1205 = vpow.pop %v1204
          %v1206 = vmul.f32 %v1195, 1.442695
          %v1207 = vpow.pop %v1206
          %v1208 = vmul.f32 %v1196, 1.442695
          %v1209 = vpow.pop %v1208
          %v1210 = vmul.f32 %v1197, 1.442695
          %v1211 = vpow.pop %v1210
          %v1212 = vmul.f32 %v1198, 1.442695
          %v1213 = vpow.pop %v1212
          %v1214 = vmul.f32 %v1199, 1.442695
          %v1215 = vpow.pop %v1214
          %v1216 = vsel %vm735, %v1201, 0.0
          %1217 = vadd.xlane.f32.xlu0 %v1216
          %v1218 = vpop.xlane.xlu0 %1217
          %v1219 = vsel %vm735, %v1203, 0.0
          %1220 = vadd.xlane.f32.xlu0 %v1219
          %v1221 = vpop.xlane.xlu0 %1220
          %v1222 = vsel %vm735, %v1205, 0.0
          %1223 = vadd.xlane.f32.xlu0 %v1222
          %v1224 = vpop.xlane.xlu0 %1223
          %v1225 = vsel %vm735, %v1207, 0.0
          %1226 = vadd.xlane.f32.xlu0 %v1225
          %v1227 = vpop.xlane.xlu0 %1226
          %v1228 = vsel %vm735, %v1209, 0.0
          %1229 = vadd.xlane.f32.xlu0 %v1228
          %v1230 = vpop.xlane.xlu0 %1229
          %v1231 = vsel %vm735, %v1211, 0.0
          %1232 = vadd.xlane.f32.xlu0 %v1231
          %v1233 = vpop.xlane.xlu0 %1232
          %v1234 = vsel %vm735, %v1213, 0.0
          %1235 = vadd.xlane.f32.xlu0 %v1234
          %v1236 = vpop.xlane.xlu0 %1235
          %v1237 = vsel %vm735, %v1215, 0.0
          %1238 = vadd.xlane.f32.xlu0 %v1237
          %v1239 = vpop.xlane.xlu0 %1238
          %v1240 = vrcp.pop %v1218
          %v1241 = vrcp.pop %v1221
          %v1242 = vrcp.pop %v1224
          %v1243 = vrcp.pop %v1227
          %v1244 = vrcp.pop %v1230
          %v1245 = vrcp.pop %v1233
          %v1246 = vrcp.pop %v1236
          %v1247 = vrcp.pop %v1239
          %v1248 = vmul.f32 %v1201, %v1240
          %v1249 = vmul.f32 %v1203, %v1241
          %v1250 = vmul.f32 %v1205, %v1242
          %v1251 = vmul.f32 %v1207, %v1243
          %v1252 = vmul.f32 %v1209, %v1244
          %v1253 = vmul.f32 %v1211, %v1245
          %v1254 = vmul.f32 %v1213, %v1246
          %v1255 = vmul.f32 %v1215, %v1247
          %1256 = vst.msk [vmem:[%s232] sm:$0xff] %vm735, %v1248
          %1257 = vst.msk [vmem:[%s232 + $0x8] sm:$0xff] %vm735, %v1249
          %1258 = vst.msk [vmem:[%s232 + $0x10] sm:$0xff] %vm735, %v1250
          %1259 = vst.msk [vmem:[%s232 + $0x18] sm:$0xff] %vm735, %v1251
          %1260 = vst.msk [vmem:[%s232 + $0x20] sm:$0xff] %vm735, %v1252
          %1261 = vst.msk [vmem:[%s232 + $0x28] sm:$0xff] %vm735, %v1253
          %1262 = vst.msk [vmem:[%s232 + $0x30] sm:$0xff] %vm735, %v1254
          %1263 = vst.msk [vmem:[%s232 + $0x38] sm:$0xff] %vm735, %v1255
        $region48: #{tpu_custom_call.1} parent=35 // pred_fallthru
          _
        %s1264 = sand.u32 %s132, 1
        %s1265 = scalar_lea.sflag [#allocation7], %s1264
        %s1266 = sand.u32 %s132, 1
        %s1267 = smul.addr %s1266, 64
        %s1268 = scalar_lea.vmem [#allocation8], %s1267
        // Predicated region
        $region49: #{tpu_custom_call.1} parent=35 // pred_check
          %p1269 = pneg %p142
        $region50: #{tpu_custom_call.1} parent=35 // pred_check_branch
          %1271 = sbr.rel (%p1269) target = $region52
        $region51: #{tpu_custom_call.1} parent=35 // pred_region
          %1273 = vsyncadd %s1265, 0
          %s1274 = smul.addr %s25, 8
          %s1275 = smul.addr %s1274, 8
          %s1276 = scalar_lea.hbm %s4, %s1275
          %s1277 = sshll.u32 %s1268, 4
          %s1278 = int_to_ptr.vmem [resolvable:$true] %s1277
          %s1279 = sshll.u32 %s1276, 4
          %s1280 = int_to_ptr.hbm [resolvable:$true] %s1279
          %1285 = dma.vmem_to_hbm [thread:$0]  %s1278, 1024, %s1280, %s1265, 128, 128, 8
        $region52: #{tpu_custom_call.1} parent=35 // pred_fallthru
          _
      $region36: #{tpu_custom_call.1} parent=5 // pred_fallthru
        _
      %p1286 = scmp.le.s32.totalorder 2, %s16
      // Predicated region
      $region53: #{tpu_custom_call.1} parent=5 // pred_check
        %p1287 = pneg %p1286
      $region54: #{tpu_custom_call.1} parent=5 // pred_check_branch
        %1289 = sbr.rel (%p1287) target = $region56
      $region55: #{tpu_custom_call.1} parent=5 // pred_region
        %s1290 = ssub.s32 %s16, 2
        // Predicated region
        $region57: #{tpu_custom_call.1} parent=55 // pred_check
          %p1291 = pneg %p148
        $region58: #{tpu_custom_call.1} parent=55 // pred_check_branch
          %1293 = sbr.rel (%p1291) target = $region60
        $region59: #{tpu_custom_call.1} parent=55 // pred_region
          %s1294 = sand.u32 %s133, 1
          %s1295 = scalar_lea.sflag [#allocation7], %s1294
          %s1296 = sand.u32 %s133, 1
          %s1297 = smul.addr %s1296, 64
          %s1298 = scalar_lea.vmem [#allocation8], %s1297
          %1300 = dma.done %s1295, 1024
        $region60: #{tpu_custom_call.1} parent=55 // pred_fallthru
          _
      $region56: #{tpu_custom_call.1} parent=5 // pred_fallthru
        _
    $region6: #{tpu_custom_call.1} parent=1 // loop_footer
      %s20 = sadd.s32 1, %s16
    $region7: #{tpu_custom_call.1} parent=1 // loop_footer_branch
      %15 = sbr.rel target = $region3
    $region8: #{tpu_custom_call.1} parent=1 // loop_exit
      _
    %1301 = vsyncpa [#allocation6], 1
    %s1302 = scalar_lea.sflag [#allocation6], 1
    %1303 = vsyncpa %s1302, 1
    %1304 = vsyncpa [#allocation7], 1
    %s1305 = scalar_lea.sflag [#allocation7], 1
    %1306 = vsyncpa %s1305, 1

</llo_original>
